<compile_context>
chip_gen: v5e
topology: v5e:2x2
jax: 0.10.0
libtpu: 0.0.40
codegen_flags: <defaults>
</compile_context>

<pallas_src>
import functools

import jax
import jax.numpy as jnp
from jax import lax
from jax.experimental import pallas as pl
from jax.experimental.pallas import tpu as pltpu


def _self_attn_kernel(x_ref, m_ref, wcb_ref, wv_ref, bv_ref, gamma_ref,
                      out_ref, *rest, tq, n_q_tiles, return_attention):
    """One (batch, query-tile) grid step.

    x_ref    : (1, C, N)  full pixel slab for this batch (resident across t)
    m_ref    : (C, C)     Wq^T @ Wk                (bf16)
    wcb_ref  : (1, C)     Wk^T @ bq                (bf16)
    wv_ref   : (C, C)     value projection weight  (bf16)
    bv_ref   : (C, 1)     value projection bias    (f32)
    gamma_ref: (1,)       scalar gamma in SMEM
    out_ref  : (1, C, tq) gamma * o + x (query slab of the output)
    rest     : [attn_ref (1, tq, N)]  + s_cache, v_cache, cb_cache scratch
    """
    if return_attention:
        attn_ref, s_cache, v_cache, cb_cache = rest
    else:
        attn_ref = None
        s_cache, v_cache, cb_cache = rest

    bf16 = jnp.bfloat16
    f32 = jnp.float32
    t = pl.program_id(1)

    # -------- once per batch: cache key-side projections in VMEM ------------
    @pl.when(t == 0)
    def _cache_key_side():
        x_b = x_ref[0].astype(bf16)                                     # (C, N)
        # s[:, j] = M x_j  with M = Wq^T Wk
        s_cache[...] = jnp.dot(m_ref[...], x_b,
                               preferred_element_type=f32).astype(bf16)
        # v[:, j] = Wv x_j + bv     (1x1 conv == per-pixel linear)
        v_cache[...] = (jnp.dot(wv_ref[...], x_b,
                                preferred_element_type=f32)
                        + bv_ref[...]).astype(bf16)
        # column-bias row of the energy: (Wk^T bq) . x_j
        cb_cache[...] = jnp.dot(wcb_ref[...], x_b,
                                preferred_element_type=f32)

    # -------- per query tile -------------------------------------------------
    if n_q_tiles == 1:
        xq = x_ref[0]                                                   # (C, N)
    else:
        start = pl.multiple_of(t * tq, tq)
        xq = x_ref[0, :, pl.ds(start, tq)]                              # (C, tq)

    # energy[i, j] = x_i^T M x_j + (Wk^T bq).x_j   (row-constant terms dropped;
    # they do not change the row softmax).
    energy = lax.dot_general(xq.astype(bf16), s_cache[...],
                             (((0,), (0,)), ((), ())),
                             preferred_element_type=f32)                # (tq, N)
    energy = energy + cb_cache[...]

    row_max = jnp.max(energy, axis=-1, keepdims=True)
    e = jnp.exp(energy - row_max)                                       # (tq, N)
    e_b = e.astype(bf16)
    gamma = gamma_ref[0]

    if attn_ref is not None:
        denom = jnp.sum(e, axis=-1, keepdims=True)                      # (tq, 1)
        attn = e / denom                                                # exact softmax
        attn_ref[0] = attn.astype(attn_ref.dtype)
        # o[c, i] = sum_j v[c, j] attn[i, j]   (v @ attn^T, trans-RHS MXU form;
        # audit note: if the bundle ever shows a per-tile vxpose here, cache
        # v^T (N, C) instead and use jnp.dot(attn, v_t)).
        o = lax.dot_general(v_cache[...], attn.astype(bf16),
                            (((1,), (1,)), ((), ())),
                            preferred_element_type=f32)                 # (C, tq)
    else:
        # Deferred normalization: never materialize the normalized (tq, N)
        # slab; scale the small (C, tq) result instead.  The row-layout
        # denominator (1, tq) comes from a ones-row matmul (no relayout).
        o_un = lax.dot_general(v_cache[...], e_b,
                               (((1,), (1,)), ((), ())),
                               preferred_element_type=f32)              # (C, tq)
        ones_row = jnp.ones((1, v_cache.shape[1]), dtype=bf16)          # (1, N)
        denom_row = lax.dot_general(ones_row, e_b,
                                    (((1,), (1,)), ((), ())),
                                    preferred_element_type=f32)         # (1, tq)
        o = o_un * pl.reciprocal(denom_row, approx=False)

    out_ref[0] = (gamma * o + xq).astype(out_ref.dtype)


def self_attn(x, wq, bq, wk, bk, wv, bv, gamma, *, return_attention=True,
              tq=None, attn_dtype=jnp.float32):
    """SAGAN self-attention forward.

    x: (B, C, W, H).  Conv-style 1x1 weights: wq, wk: (C//8, C); bq, bk: (C//8,);
    wv: (C, C); bv: (C,); gamma: (1,).
    Returns (out (B,C,W,H), attention (B,N,N) or None, gamma).
    Note: bk only contributes row-constant energy terms, which cancel in the
    row softmax, so it does not affect attention or out (matches PyTorch).
    """
    B, C, W, H = x.shape
    N = W * H

    if tq is None:
        if N <= 2048 or N % 128 != 0:
            tq = N                      # small problem: one fat tile per batch
        elif N % 512 == 0:
            tq = 512
        elif N % 256 == 0:
            tq = 256
        else:
            tq = 128
    assert N % tq == 0, "query tile must divide N = W*H"
    n_q_tiles = N // tq

    f32, bf16 = jnp.float32, jnp.bfloat16

    # channel-major, pixel-on-lane layout; pure reshape, no HBM transpose
    x_cn = x.reshape(B, C, N)

    # Fuse the query/key projections into the energy bilinear form.
    m_mat = jnp.dot(wq.astype(f32).T, wk.astype(f32)).astype(bf16)            # (C, C)
    w_colbias = jnp.dot(bq.astype(f32), wk.astype(f32)).reshape(1, C).astype(bf16)
    wv_b = wv.astype(bf16)                                                    # (C, C)
    bv_col = bv.astype(f32).reshape(C, 1)                                     # (C, 1)
    gamma_arr = gamma.astype(f32).reshape(1)

    out_shapes = [jax.ShapeDtypeStruct((B, C, N), x.dtype)]
    out_specs = [pl.BlockSpec((1, C, tq), lambda b, t: (b, 0, t))]
    if return_attention:
        out_shapes.append(jax.ShapeDtypeStruct((B, N, N), attn_dtype))
        out_specs.append(pl.BlockSpec((1, tq, N), lambda b, t: (b, t, 0)))

    # ---- VMEM accounting: block windows (2x buffered) + scratch + temporaries
    xb = jnp.dtype(x.dtype).itemsize
    ab = jnp.dtype(attn_dtype).itemsize if return_attention else 0
    block_bytes = 2 * (C * N * xb                    # x slab
                       + C * tq * xb                 # out slab
                       + tq * N * ab                 # attn slab
                       + 2 * C * C * 2               # M, Wv (bf16)
                       + C * 2 + C * 4)              # colbias row, bv
    scratch_bytes = 2 * C * N * 2 + N * 4            # s, v (bf16) + colbias (f32)
    temp_bytes = 3 * tq * N * 4 + C * N * 2 + 4 * C * tq * 4
    needed = block_bytes + scratch_bytes + temp_bytes
    try:
        vmem_cap = pltpu.get_tpu_info().vmem_capacity_bytes
    except Exception:
        vmem_cap = 64 * 1024 * 1024                  # v7x per-TC floor
    vmem_limit = int(min(int(0.85 * vmem_cap),
                         max(needed + (4 << 20), 32 << 20)))
    # Note: for very large C*N on v7x, shrink tq (or add an online-softmax key
    # loop) rather than raising the limit past ~85% of physical VMEM.

    kernel = functools.partial(_self_attn_kernel, tq=tq, n_q_tiles=n_q_tiles,
                               return_attention=return_attention)

    outs = pl.pallas_call(
        kernel,
        out_shape=tuple(out_shapes),
        grid_spec=pltpu.PrefetchScalarGridSpec(
            num_scalar_prefetch=0,
            grid=(B, n_q_tiles),
            in_specs=[
                pl.BlockSpec((1, C, N), lambda b, t: (b, 0, 0)),  # x (resident over t)
                pl.BlockSpec((C, C), lambda b, t: (0, 0)),        # M = Wq^T Wk (bf16)
                pl.BlockSpec((1, C), lambda b, t: (0, 0)),        # Wk^T bq (bf16)
                pl.BlockSpec((C, C), lambda b, t: (0, 0)),        # Wv (bf16)
                pl.BlockSpec((C, 1), lambda b, t: (0, 0)),        # bv (f32)
                pl.BlockSpec(memory_space=pltpu.SMEM),            # gamma scalar
            ],
            out_specs=tuple(out_specs),
            scratch_shapes=[
                pltpu.VMEM((C, N), bf16),    # s = M @ x        (per-batch cache)
                pltpu.VMEM((C, N), bf16),    # v = Wv @ x + bv  (per-batch cache)
                pltpu.VMEM((1, N), f32),     # colbias row      (per-batch cache)
            ],
        ),
        compiler_params=pltpu.CompilerParams(
            dimension_semantics=("parallel", "arbitrary"),
            vmem_limit_bytes=vmem_limit),
    )(x_cn, m_mat, w_colbias, wv_b, bv_col, gamma_arr)

    if return_attention:
        out_cn, attn = outs
    else:
        out_cn = outs[0]
        attn = None

    out = out_cn.reshape(B, C, W, H)   # pure reshape, no transpose
    return out, attn, gamma


if __name__ == "__main__":
    key = jax.random.PRNGKey(0)
    B, C, W, H = 2, 16, 16, 16          # in_channels=16 -> query/key channels = 2
    C8 = C // 8
    N = W * H

    ks = jax.random.split(key, 8)
    x = jax.random.normal(ks[0], (B, C, W, H), dtype=jnp.float32)

    # conv-style 1x1 weights: (C_out, C_in), biases (C_out,)
    wq = jax.random.normal(ks[1], (C8, C), dtype=jnp.float32) * 0.1
    bq = jax.random.normal(ks[2], (C8,), dtype=jnp.float32) * 0.1
    wk = jax.random.normal(ks[3], (C8, C), dtype=jnp.float32) * 0.1
    bk = jax.random.normal(ks[4], (C8,), dtype=jnp.float32) * 0.1
    wv = jax.random.normal(ks[5], (C, C), dtype=jnp.float32) * 0.1
    bv = jax.random.normal(ks[6], (C,), dtype=jnp.float32) * 0.1
    gamma = jnp.array([0.7], dtype=jnp.float32)   # nonzero: exercise the full path

    # pure-JAX reference (matches the PyTorch Self_Attn forward exactly)
    xf = x.reshape(B, C, N)
    q = jnp.einsum('oc,bcn->bon', wq, xf) + bq[None, :, None]
    k = jnp.einsum('oc,bcn->bon', wk, xf) + bk[None, :, None]
    v = jnp.einsum('oc,bcn->bon', wv, xf) + bv[None, :, None]
    energy = jnp.einsum('bci,bcj->bij', q, k)
    attn_expected = jax.nn.softmax(energy, axis=-1)
    o = jnp.einsum('bcj,bij->bci', v, attn_expected)
    out_expected = (gamma[0] * o + xf).reshape(B, C, W, H)

    # 1) default path: tq = N -> grid (B, 1), attention returned
    out, attn, g = self_attn(x, wq, bq, wk, bk, wv, bv, gamma)
    jax.block_until_ready((out, attn, g))
    assert out.shape == (B, C, W, H) and attn.shape == (B, N, N)
    assert jnp.allclose(jnp.sum(attn, axis=-1), 1.0, atol=1e-3)
    assert jnp.allclose(attn, attn_expected, atol=2e-3)
    assert jnp.allclose(out, out_expected, atol=2e-2, rtol=2e-2)

    # 2) tiled path (grid (B, N//128)): exercises the per-batch VMEM cache and
    #    the in-kernel dynamic query-tile slicing
    out_t, attn_t, _ = self_attn(x, wq, bq, wk, bk, wv, bv, gamma, tq=128)
    jax.block_until_ready((out_t, attn_t))
    assert jnp.allclose(attn_t, attn_expected, atol=2e-3)
    assert jnp.allclose(out_t, out_expected, atol=2e-2, rtol=2e-2)

    # 3) out-only path: no (B, N, N) HBM writeback, deferred normalization
    out_f, attn_f, _ = self_attn(x, wq, bq, wk, bk, wv, bv, gamma,
                                 return_attention=False)
    jax.block_until_ready(out_f)
    assert attn_f is None
    assert jnp.allclose(out_f, out_expected, atol=2e-2, rtol=2e-2)

    print("KERNEL_OK")
</pallas_src>

<mosaic_0001>
module attributes {stable_mosaic.version = 11 : i64} {
  func.func @_self_attn_kernel(%arg0: i32, %arg1: i32, %arg2: memref<1x16x256xf32, #tpu.memory_space<vmem>>, %arg3: memref<16x16xbf16, #tpu.memory_space<vmem>>, %arg4: memref<1x16xbf16, #tpu.memory_space<vmem>>, %arg5: memref<16x16xbf16, #tpu.memory_space<vmem>>, %arg6: memref<16x1xf32, #tpu.memory_space<vmem>>, %arg7: memref<1xf32, #tpu.memory_space<smem>>, %arg8: memref<1x16x256xf32, #tpu.memory_space<vmem>>, %arg9: memref<1x256x256xf32, #tpu.memory_space<vmem>>, %arg10: memref<16x256xbf16, #tpu.memory_space<vmem>>, %arg11: memref<16x256xbf16, #tpu.memory_space<vmem>>, %arg12: memref<1x256xf32, #tpu.memory_space<vmem>>) attributes {dimension_semantics = [#tpu.dimension_semantics<parallel>, #tpu.dimension_semantics<arbitrary>], iteration_bounds = array<i64: 2, 1>, scalar_prefetch = 0 : i64, scratch_operands = 3 : i64, tpu.core_type = #tpu.core_type<tc>, window_params = [{transform_indices = @transform_0, window_bounds = array<i64: 1, 16, 256>}, {pipeline_mode = #tpu.pipeline_mode<synchronous>, transform_indices = @transform_1, window_bounds = array<i64: 16, 16>}, {pipeline_mode = #tpu.pipeline_mode<synchronous>, transform_indices = @transform_2, window_bounds = array<i64: 1, 16>}, {pipeline_mode = #tpu.pipeline_mode<synchronous>, transform_indices = @transform_3, window_bounds = array<i64: 16, 16>}, {pipeline_mode = #tpu.pipeline_mode<synchronous>, transform_indices = @transform_4, window_bounds = array<i64: 16, 1>}, {transform_indices = @transform_5, window_bounds = array<i64: 1>}, {transform_indices = @transform_6, window_bounds = array<i64: 1, 16, 256>}, {transform_indices = @transform_7, window_bounds = array<i64: 1, 256, 256>}]} {
    %c0_i32 = arith.constant 0 : i32
    %0 = arith.cmpi eq, %arg1, %c0_i32 : i32
    %1 = arith.extui %0 : i1 to i32
    %c0_i32_0 = arith.constant 0 : i32
    %2 = arith.cmpi ne, %1, %c0_i32_0 : i32
    scf.if %2 {
      %c0_19 = arith.constant 0 : index
      %c0_20 = arith.constant 0 : index
      %c0_21 = arith.constant 0 : index
      %33 = vector.load %arg2[%c0_19, %c0_20, %c0_21] : memref<1x16x256xf32, #tpu.memory_space<vmem>>, vector<1x16x256xf32>
      %34 = vector.shape_cast %33 : vector<1x16x256xf32> to vector<16x256xf32>
      %35 = arith.truncf %34 : vector<16x256xf32> to vector<16x256xbf16>
      %c0_22 = arith.constant 0 : index
      %c0_23 = arith.constant 0 : index
      %36 = vector.load %arg3[%c0_22, %c0_23] : memref<16x16xbf16, #tpu.memory_space<vmem>>, vector<16x16xbf16>
      %cst_24 = arith.constant dense<0.000000e+00> : vector<16x256xf32>
      %37 = tpu.matmul %36, %35, %cst_24 {dimension_numbers = #tpu.dot_dimension_numbers<[1], [0], [0], [1], [0, 0, 1, 1], [], []>} : vector<16x16xbf16>, vector<16x256xbf16>, vector<16x256xf32> -> vector<16x256xf32>
      %38 = arith.truncf %37 : vector<16x256xf32> to vector<16x256xbf16>
      %c0_25 = arith.constant 0 : index
      %c0_26 = arith.constant 0 : index
      %39 = vector.load %arg10[%c0_25, %c0_26] : memref<16x256xbf16, #tpu.memory_space<vmem>>, vector<16x256xbf16>
      tpu.vector_store %arg10[%c0_25, %c0_26], %38 {strides = array<i32>} : memref<16x256xbf16, #tpu.memory_space<vmem>>, vector<16x256xbf16>,
      %c0_27 = arith.constant 0 : index
      %c0_28 = arith.constant 0 : index
      %40 = vector.load %arg5[%c0_27, %c0_28] : memref<16x16xbf16, #tpu.memory_space<vmem>>, vector<16x16xbf16>
      %cst_29 = arith.constant dense<0.000000e+00> : vector<16x256xf32>
      %41 = tpu.matmul %40, %35, %cst_29 {dimension_numbers = #tpu.dot_dimension_numbers<[1], [0], [0], [1], [0, 0, 1, 1], [], []>} : vector<16x16xbf16>, vector<16x256xbf16>, vector<16x256xf32> -> vector<16x256xf32>
      %c0_30 = arith.constant 0 : index
      %c0_31 = arith.constant 0 : index
      %42 = vector.load %arg6[%c0_30, %c0_31] : memref<16x1xf32, #tpu.memory_space<vmem>>, vector<16x1xf32>
      %43 = vector.broadcast %42 : vector<16x1xf32> to vector<16x256xf32>
      %44 = arith.addf %41, %43 : vector<16x256xf32>
      %45 = arith.truncf %44 : vector<16x256xf32> to vector<16x256xbf16>
      %c0_32 = arith.constant 0 : index
      %c0_33 = arith.constant 0 : index
      %46 = vector.load %arg11[%c0_32, %c0_33] : memref<16x256xbf16, #tpu.memory_space<vmem>>, vector<16x256xbf16>
      tpu.vector_store %arg11[%c0_32, %c0_33], %45 {strides = array<i32>} : memref<16x256xbf16, #tpu.memory_space<vmem>>, vector<16x256xbf16>,
      %c0_34 = arith.constant 0 : index
      %c0_35 = arith.constant 0 : index
      %47 = vector.load %arg4[%c0_34, %c0_35] : memref<1x16xbf16, #tpu.memory_space<vmem>>, vector<1x16xbf16>
      %cst_36 = arith.constant dense<0.000000e+00> : vector<1x256xf32>
      %48 = tpu.matmul %47, %35, %cst_36 {dimension_numbers = #tpu.dot_dimension_numbers<[1], [0], [0], [1], [0, 0, 1, 1], [], []>} : vector<1x16xbf16>, vector<16x256xbf16>, vector<1x256xf32> -> vector<1x256xf32>
      %c0_37 = arith.constant 0 : index
      %c0_38 = arith.constant 0 : index
      %49 = vector.load %arg12[%c0_37, %c0_38] : memref<1x256xf32, #tpu.memory_space<vmem>>, vector<1x256xf32>
      tpu.vector_store %arg12[%c0_37, %c0_38], %48 {strides = array<i32>} : memref<1x256xf32, #tpu.memory_space<vmem>>, vector<1x256xf32>,
    } else {
    }
    %c0 = arith.constant 0 : index
    %c0_1 = arith.constant 0 : index
    %c0_2 = arith.constant 0 : index
    %3 = vector.load %arg2[%c0, %c0_1, %c0_2] : memref<1x16x256xf32, #tpu.memory_space<vmem>>, vector<1x16x256xf32>
    %4 = vector.shape_cast %3 : vector<1x16x256xf32> to vector<16x256xf32>
    %5 = arith.truncf %4 : vector<16x256xf32> to vector<16x256xbf16>
    %c0_3 = arith.constant 0 : index
    %c0_4 = arith.constant 0 : index
    %6 = vector.load %arg10[%c0_3, %c0_4] : memref<16x256xbf16, #tpu.memory_space<vmem>>, vector<16x256xbf16>
    %cst = arith.constant dense<0.000000e+00> : vector<256x256xf32>
    %7 = tpu.matmul %5, %6, %cst {dimension_numbers = #tpu.dot_dimension_numbers<[0], [0], [1], [1], [0, 1, 1, 1], [], []>} : vector<16x256xbf16>, vector<16x256xbf16>, vector<256x256xf32> -> vector<256x256xf32>
    %c0_5 = arith.constant 0 : index
    %c0_6 = arith.constant 0 : index
    %8 = vector.load %arg12[%c0_5, %c0_6] : memref<1x256xf32, #tpu.memory_space<vmem>>, vector<1x256xf32>
    %9 = vector.broadcast %8 : vector<1x256xf32> to vector<256x256xf32>
    %10 = arith.addf %7, %9 : vector<256x256xf32>
    %cst_7 = arith.constant dense<0xFF800000> : vector<256xf32>
    %11 = vector.multi_reduction <maximumf>, %10, %cst_7 [1] : vector<256x256xf32> to vector<256xf32>
    %12 = vector.shape_cast %11 : vector<256xf32> to vector<256x1xf32>
    %13 = vector.broadcast %12 : vector<256x1xf32> to vector<256x256xf32>
    %14 = arith.subf %10, %13 : vector<256x256xf32>
    %15 = math.exp %14 : vector<256x256xf32>
    %c0_8 = arith.constant 0 : index
    %16 = memref.load %arg7[%c0_8] : memref<1xf32, #tpu.memory_space<smem>>
    %cst_9 = arith.constant dense<0.000000e+00> : vector<256xf32>
    %17 = vector.multi_reduction <add>, %15, %cst_9 [1] : vector<256x256xf32> to vector<256xf32>
    %18 = vector.shape_cast %17 : vector<256xf32> to vector<256x1xf32>
    %19 = vector.broadcast %18 : vector<256x1xf32> to vector<256x256xf32>
    %20 = arith.divf %15, %19 : vector<256x256xf32>
    %c0_10 = arith.constant 0 : index
    %c0_11 = arith.constant 0 : index
    %c0_12 = arith.constant 0 : index
    %21 = vector.load %arg9[%c0_10, %c0_11, %c0_12] : memref<1x256x256xf32, #tpu.memory_space<vmem>>, vector<1x256x256xf32>
    %22 = vector.shape_cast %21 : vector<1x256x256xf32> to vector<256x256xf32>
    %23 = vector.shape_cast %20 : vector<256x256xf32> to vector<1x256x256xf32>
    tpu.vector_store %arg9[%c0_10, %c0_11, %c0_12], %23 {strides = array<i32>} : memref<1x256x256xf32, #tpu.memory_space<vmem>>, vector<1x256x256xf32>,
    %c0_13 = arith.constant 0 : index
    %c0_14 = arith.constant 0 : index
    %24 = vector.load %arg11[%c0_13, %c0_14] : memref<16x256xbf16, #tpu.memory_space<vmem>>, vector<16x256xbf16>
    %25 = arith.truncf %20 : vector<256x256xf32> to vector<256x256xbf16>
    %cst_15 = arith.constant dense<0.000000e+00> : vector<16x256xf32>
    %26 = tpu.matmul %24, %25, %cst_15 {dimension_numbers = #tpu.dot_dimension_numbers<[1], [1], [0], [0], [0, 0, 1, 0], [], []>} : vector<16x256xbf16>, vector<256x256xbf16>, vector<16x256xf32> -> vector<16x256xf32>
    %27 = vector.broadcast %16 : f32 to vector<16x256xf32>
    %28 = arith.mulf %27, %26 : vector<16x256xf32>
    %29 = arith.addf %28, %4 : vector<16x256xf32>
    %c0_16 = arith.constant 0 : index
    %c0_17 = arith.constant 0 : index
    %c0_18 = arith.constant 0 : index
    %30 = vector.load %arg8[%c0_16, %c0_17, %c0_18] : memref<1x16x256xf32, #tpu.memory_space<vmem>>, vector<1x16x256xf32>
    %31 = vector.shape_cast %30 : vector<1x16x256xf32> to vector<16x256xf32>
    %32 = vector.shape_cast %29 : vector<16x256xf32> to vector<1x16x256xf32>
    tpu.vector_store %arg8[%c0_16, %c0_17, %c0_18], %32 {strides = array<i32>} : memref<1x16x256xf32, #tpu.memory_space<vmem>>, vector<1x16x256xf32>,
    return
  }
  func.func @transform_0(%arg0: i32, %arg1: i32) -> (i32, i32, i32) {
    %c0_i32 = arith.constant 0 : i32
    %c0_i32_0 = arith.constant 0 : i32
    %c0_i32_1 = arith.constant 0 : i32
    return %arg0, %c0_i32, %c0_i32_0 : i32, i32, i32
  }
  func.func @transform_1(%arg0: i32, %arg1: i32) -> (i32, i32) {
    %c0_i32 = arith.constant 0 : i32
    %c0_i32_0 = arith.constant 0 : i32
    %c0_i32_1 = arith.constant 0 : i32
    return %c0_i32, %c0_i32_0 : i32, i32
  }
  func.func @transform_2(%arg0: i32, %arg1: i32) -> (i32, i32) {
    %c0_i32 = arith.constant 0 : i32
    %c0_i32_0 = arith.constant 0 : i32
    %c0_i32_1 = arith.constant 0 : i32
    return %c0_i32, %c0_i32_0 : i32, i32
  }
  func.func @transform_3(%arg0: i32, %arg1: i32) -> (i32, i32) {
    %c0_i32 = arith.constant 0 : i32
    %c0_i32_0 = arith.constant 0 : i32
    %c0_i32_1 = arith.constant 0 : i32
    return %c0_i32, %c0_i32_0 : i32, i32
  }
  func.func @transform_4(%arg0: i32, %arg1: i32) -> (i32, i32) {
    %c0_i32 = arith.constant 0 : i32
    %c0_i32_0 = arith.constant 0 : i32
    %c0_i32_1 = arith.constant 0 : i32
    return %c0_i32, %c0_i32_0 : i32, i32
  }
  func.func @transform_5(%arg0: i32, %arg1: i32) -> i32 {
    %c0_i32 = arith.constant 0 : i32
    %c0_i32_0 = arith.constant 0 : i32
    return %c0_i32 : i32
  }
  func.func @transform_6(%arg0: i32, %arg1: i32) -> (i32, i32, i32) {
    %c0_i32 = arith.constant 0 : i32
    %c0_i32_0 = arith.constant 0 : i32
    return %arg0, %c0_i32, %arg1 : i32, i32, i32
  }
  func.func @transform_7(%arg0: i32, %arg1: i32) -> (i32, i32, i32) {
    %c0_i32 = arith.constant 0 : i32
    %c0_i32_0 = arith.constant 0 : i32
    return %arg0, %arg1, %c0_i32 : i32, i32, i32
  }
}

</mosaic_0001>

<llo_original>
// kernel: tpu_custom_call.1
$region0: #{tpu_custom_call.1}
  #allocation0 [shape = 'u32[]', space=smem, size = 0x4, offset = 0x4, fixed_abs, tag = 'smem constant byte address 0x4 - core index']
  #allocation1 [shape = 'u32[72,128]{1,0:T(1,128)}', space=vmem, size = 0x9000, scoped, tag = 'internal scratch']
  #allocation2 [shape = 'bf16[16,256]{1,0:T(8,128)(2,1)}', space=vmem, size = 0x2000, scoped, tag = 'scratch operand']
  #allocation3 [shape = 'bf16[16,256]{1,0:T(8,128)(2,1)}', space=vmem, size = 0x2000, scoped, tag = 'scratch operand']
  #allocation4 [shape = 'f32[1,256]{1,0:T(1,128)}', space=vmem, size = 0x400, scoped, tag = 'scratch operand']
  #allocation5 [shape = 'f32[1]{0:T(128)S(6)}', space=smem, size = 0x200, scoped, tag = 'scoped memory for tpu_custom_call.1']
  %s0 = inlined_call_operand.hbm [shape: f32[2,16,256], index: 0, kind: input, shape index: {}]
  %s1 = inlined_call_operand.vmem [shape: bf16[16,16], index: 1, kind: input, shape index: {}]
  %s2 = inlined_call_operand.vmem [shape: bf16[1,16], index: 2, kind: input, shape index: {}]
  %s3 = inlined_call_operand.vmem [shape: bf16[16,16], index: 3, kind: input, shape index: {}]
  %s4 = inlined_call_operand.vmem [shape: f32[16,1], index: 4, kind: input, shape index: {}]
  %s5 = inlined_call_operand.<no memory space> [shape: f32[1], index: 5, kind: input, shape index: {}]
  %s6 = inlined_call_operand.hbm [shape: f32[2,16,256], index: 6, kind: output, shape index: {0}]
  %s7 = inlined_call_operand.hbm [shape: f32[2,256,256], index: 7, kind: output, shape index: {1}]
  %8 = xla_tuple %s6, %s7
  %s9 = sld [smem:[#allocation0]]
  $region73: #{tpu_custom_call.1} parent=0
    _
  %s11 = ssub.s32 1, %s9
  %s12 = scalar_select 0, %s11, %s9
  %13 = sst [smem:[#allocation5]] %s5
  $region1: #{tpu_custom_call.1} parent=0
    #allocation6 [shape = 'u8[32768]{0}', space=vmem, size = 0x8000, scoped, tag = 'input window, operand 0']
    #allocation7 [shape = 's32[2]{0}', space=sflag, size = 0x8, scoped, tag = 'scoped memory for tpu_custom_call.1']
    #allocation8 [shape = 's32[2]{0}', space=sflag, size = 0x8, scoped, tag = 'scoped memory for tpu_custom_call.1']
    #allocation9 [shape = 'u8[32768]{0}', space=vmem, size = 0x8000, scoped, tag = 'output window, operand 0']
    #allocation10 [shape = 'u8[524288]{0}', space=vmem, size = 0x80000, scoped, tag = 'output window, operand 1']
    #allocation11 [shape = 's32[2]{0}', space=sflag, size = 0x8, scoped, tag = 'scoped memory for tpu_custom_call.1']
    %14 = vsyncpa [#allocation7], 0
    %s15 = scalar_lea.sflag [#allocation7], 1
    %16 = vsyncpa %s15, 0
    %17 = vsyncpa [#allocation8], 0
    %s18 = scalar_lea.sflag [#allocation8], 1
    %19 = vsyncpa %s18, 0
    %20 = vsyncpa [#allocation11], 0
    %s21 = scalar_lea.sflag [#allocation11], 1
    %22 = vsyncpa %s21, 0
    loop: start=0, step=1, limit=4
    $region2: #{tpu_custom_call.1} parent=1 // loop_pre_header
      _
    $region3: #{tpu_custom_call.1} parent=1 // loop_header
      %s24 = sphi 0, %s28
      %p25 = scmp.ge.s32.totalorder %s24, 4
      %s31 = sphi 0, %s43
      %s32 = sphi 0, %s39
      %s33 = sphi 0, %s31
      %s34 = sphi 0, %s32
      %s35 = sphi 0, %s33
      %s36 = sphi 0, %s34
      %s46 = sphi 0, %s48
      %s49 = sphi 0, %s46
      %s50 = sphi 0, %s49
      %s66 = sphi 0, %s50
      %s70 = sphi 0, %s70
      %s72 = sphi 0, %s70
      %s73 = sphi 0, %s72
      %s87 = sphi 0, %s73
      %s91 = sphi 0, %s91
      %s93 = sphi 0, %s91
      %s94 = sphi 0, %s93
      %s108 = sphi 0, %s94
      %s112 = sphi 0, %s112
      %s114 = sphi 0, %s112
      %s115 = sphi 0, %s114
      %s129 = sphi 0, %s115
      %s133 = sphi 0, %s133
      %s135 = sphi 0, %s133
      %s136 = sphi 0, %s135
      %s150 = sphi 0, %s136
      %s154 = sphi 0, %s154
      %s156 = sphi 0, %s154
      %s157 = sphi 0, %s156
      %s171 = sphi 0, %s157
      %s179 = sphi 0, %s181
      %s182 = sphi 0, %s179
      %s183 = sphi 0, %s182
      %s199 = sphi 0, %s183
      %s207 = sphi 0, %s209
      %s210 = sphi 0, %s207
      %s211 = sphi 0, %s210
      %s227 = sphi 0, %s211
    $region4: #{tpu_custom_call.1} parent=1 // loop_header_branch
      %27 = sbr.rel (%p25) target = $region8
    $region5: #{tpu_custom_call.1} parent=1 // loop_body
      %s29 = ssub.s32 %s24, 1
      %s30 = ssub.s32 %s24, 2
      %s37 = sadd.s32 1, %s32
      %p38 = scmp.ge.s32.totalorder %s37, 1
      %s39 = scalar_select %p38, 0, %s37
      %s40 = sadd.s32 1, %s31
      %s41 = scalar_select %p38, %s40, %s31
      %p42 = scmp.ge.s32.totalorder %s41, 2
      %s43 = scalar_select %p42, 0, %s41
      %s44 = ssub.s32 %s31, %s43
      %p45 = scmp.eq.s32.totalorder %s44, 0
      %s47 = sadd.s32 %s46, 1
      %s48 = scalar_select %p45, %s46, %s47
      %p51 = pneg %p45
      %p52 = scmp.eq.s32.totalorder %s24, 1
      %p53 = por %p51, %p52
      %p54 = scmp.ne.s32.totalorder %s46, %s49
      %p55 = scmp.eq.s32.totalorder %s24, 0
      %p56 = por %p54, %p55
      %p57 = scmp.ne.s32.totalorder %s46, %s49
      %p58 = scmp.eq.s32.totalorder %s29, 1
      %p59 = por %p57, %p58
      %p60 = scmp.ne.s32.totalorder %s49, %s50
      %p61 = scmp.eq.s32.totalorder %s29, 0
      %p62 = por %p60, %p61
      %p63 = scmp.ne.s32.totalorder %s49, %s50
      %p64 = scmp.eq.s32.totalorder %s30, 1
      %p65 = por %p63, %p64
      %p67 = scmp.ne.s32.totalorder %s50, %s66
      %p68 = scmp.eq.s32.totalorder %s30, 0
      %p69 = por %p67, %p68
      %s71 = sadd.s32 %s70, 1
      %p74 = scmp.eq.s32.totalorder %s24, 1
      %p75 = scmp.ne.s32.totalorder %s70, %s72
      %p76 = scmp.eq.s32.totalorder %s24, 0
      %p77 = por %p75, %p76
      %p78 = scmp.ne.s32.totalorder %s70, %s72
      %p79 = scmp.eq.s32.totalorder %s29, 1
      %p80 = por %p78, %p79
      %p81 = scmp.ne.s32.totalorder %s72, %s73
      %p82 = scmp.eq.s32.totalorder %s29, 0
      %p83 = por %p81, %p82
      %p84 = scmp.ne.s32.totalorder %s72, %s73
      %p85 = scmp.eq.s32.totalorder %s30, 1
      %p86 = por %p84, %p85
      %p88 = scmp.ne.s32.totalorder %s73, %s87
      %p89 = scmp.eq.s32.totalorder %s30, 0
      %p90 = por %p88, %p89
      %s92 = sadd.s32 %s91, 1
      %p95 = scmp.eq.s32.totalorder %s24, 1
      %p96 = scmp.ne.s32.totalorder %s91, %s93
      %p97 = scmp.eq.s32.totalorder %s24, 0
      %p98 = por %p96, %p97
      %p99 = scmp.ne.s32.totalorder %s91, %s93
      %p100 = scmp.eq.s32.totalorder %s29, 1
      %p101 = por %p99, %p100
      %p102 = scmp.ne.s32.totalorder %s93, %s94
      %p103 = scmp.eq.s32.totalorder %s29, 0
      %p104 = por %p102, %p103
      %p105 = scmp.ne.s32.totalorder %s93, %s94
      %p106 = scmp.eq.s32.totalorder %s30, 1
      %p107 = por %p105, %p106
      %p109 = scmp.ne.s32.totalorder %s94, %s108
      %p110 = scmp.eq.s32.totalorder %s30, 0
      %p111 = por %p109, %p110
      %s113 = sadd.s32 %s112, 1
      %p116 = scmp.eq.s32.totalorder %s24, 1
      %p117 = scmp.ne.s32.totalorder %s112, %s114
      %p118 = scmp.eq.s32.totalorder %s24, 0
      %p119 = por %p117, %p118
      %p120 = scmp.ne.s32.totalorder %s112, %s114
      %p121 = scmp.eq.s32.totalorder %s29, 1
      %p122 = por %p120, %p121
      %p123 = scmp.ne.s32.totalorder %s114, %s115
      %p124 = scmp.eq.s32.totalorder %s29, 0
      %p125 = por %p123, %p124
      %p126 = scmp.ne.s32.totalorder %s114, %s115
      %p127 = scmp.eq.s32.totalorder %s30, 1
      %p128 = por %p126, %p127
      %p130 = scmp.ne.s32.totalorder %s115, %s129
      %p131 = scmp.eq.s32.totalorder %s30, 0
      %p132 = por %p130, %p131
      %s134 = sadd.s32 %s133, 1
      %p137 = scmp.eq.s32.totalorder %s24, 1
      %p138 = scmp.ne.s32.totalorder %s133, %s135
      %p139 = scmp.eq.s32.totalorder %s24, 0
      %p140 = por %p138, %p139
      %p141 = scmp.ne.s32.totalorder %s133, %s135
      %p142 = scmp.eq.s32.totalorder %s29, 1
      %p143 = por %p141, %p142
      %p144 = scmp.ne.s32.totalorder %s135, %s136
      %p145 = scmp.eq.s32.totalorder %s29, 0
      %p146 = por %p144, %p145
      %p147 = scmp.ne.s32.totalorder %s135, %s136
      %p148 = scmp.eq.s32.totalorder %s30, 1
      %p149 = por %p147, %p148
      %p151 = scmp.ne.s32.totalorder %s136, %s150
      %p152 = scmp.eq.s32.totalorder %s30, 0
      %p153 = por %p151, %p152
      %s155 = sadd.s32 %s154, 1
      %p158 = scmp.eq.s32.totalorder %s24, 1
      %p159 = scmp.ne.s32.totalorder %s154, %s156
      %p160 = scmp.eq.s32.totalorder %s24, 0
      %p161 = por %p159, %p160
      %p162 = scmp.ne.s32.totalorder %s154, %s156
      %p163 = scmp.eq.s32.totalorder %s29, 1
      %p164 = por %p162, %p163
      %p165 = scmp.ne.s32.totalorder %s156, %s157
      %p166 = scmp.eq.s32.totalorder %s29, 0
      %p167 = por %p165, %p166
      %p168 = scmp.ne.s32.totalorder %s156, %s157
      %p169 = scmp.eq.s32.totalorder %s30, 1
      %p170 = por %p168, %p169
      %p172 = scmp.ne.s32.totalorder %s157, %s171
      %p173 = scmp.eq.s32.totalorder %s30, 0
      %p174 = por %p172, %p173
      %s175 = ssub.s32 %s31, %s43
      %s176 = ssub.s32 %s32, %s39
      %s177 = sor.u32 %s175, %s176
      %p178 = scmp.eq.s32.totalorder %s177, 0
      %s180 = sadd.s32 %s179, 1
      %s181 = scalar_select %p178, %s179, %s180
      %p184 = pneg %p178
      %p185 = scmp.eq.s32.totalorder %s24, 1
      %p186 = por %p184, %p185
      %p187 = scmp.ne.s32.totalorder %s179, %s182
      %p188 = scmp.eq.s32.totalorder %s24, 0
      %p189 = por %p187, %p188
      %p190 = scmp.ne.s32.totalorder %s179, %s182
      %p191 = scmp.eq.s32.totalorder %s29, 1
      %p192 = por %p190, %p191
      %p193 = scmp.ne.s32.totalorder %s182, %s183
      %p194 = scmp.eq.s32.totalorder %s29, 0
      %p195 = por %p193, %p194
      %p196 = scmp.ne.s32.totalorder %s182, %s183
      %p197 = scmp.eq.s32.totalorder %s30, 1
      %p198 = por %p196, %p197
      %p200 = scmp.ne.s32.totalorder %s183, %s199
      %p201 = scmp.eq.s32.totalorder %s30, 0
      %p202 = por %p200, %p201
      %s203 = ssub.s32 %s31, %s43
      %s204 = ssub.s32 %s32, %s39
      %s205 = sor.u32 %s203, %s204
      %p206 = scmp.eq.s32.totalorder %s205, 0
      %s208 = sadd.s32 %s207, 1
      %s209 = scalar_select %p206, %s207, %s208
      %p212 = pneg %p206
      %p213 = scmp.eq.s32.totalorder %s24, 1
      %p214 = por %p212, %p213
      %p215 = scmp.ne.s32.totalorder %s207, %s210
      %p216 = scmp.eq.s32.totalorder %s24, 0
      %p217 = por %p215, %p216
      %p218 = scmp.ne.s32.totalorder %s207, %s210
      %p219 = scmp.eq.s32.totalorder %s29, 1
      %p220 = por %p218, %p219
      %p221 = scmp.ne.s32.totalorder %s210, %s211
      %p222 = scmp.eq.s32.totalorder %s29, 0
      %p223 = por %p221, %p222
      %p224 = scmp.ne.s32.totalorder %s210, %s211
      %p225 = scmp.eq.s32.totalorder %s30, 1
      %p226 = por %p224, %p225
      %p228 = scmp.ne.s32.totalorder %s211, %s227
      %p229 = scmp.eq.s32.totalorder %s30, 0
      %p230 = por %p228, %p229
      %p231 = scmp.le.s32.totalorder 1, %s24
      %p232 = scmp.lt.s32.totalorder %s24, 3
      %p233 = pnand %p231, %p232
      %p234 = pneg %p233
      // Predicated region
      $region9: #{tpu_custom_call.1} parent=5 // pred_check
        _
      $region10: #{tpu_custom_call.1} parent=5 // pred_check_branch
        %236 = sbr.rel (%p233) target = $region12
      $region11: #{tpu_custom_call.1} parent=5 // pred_region
        %s237 = ssub.s32 %s24, 1
        // Predicated region
        $region13: #{tpu_custom_call.1} parent=11 // pred_check
          %p238 = pneg %p83
        $region14: #{tpu_custom_call.1} parent=11 // pred_check_branch
          %240 = sbr.rel (%p238) target = $region16
        $region15: #{tpu_custom_call.1} parent=11 // pred_region
          _
        $region16: #{tpu_custom_call.1} parent=11 // pred_fallthru
          _
        // Predicated region
        $region17: #{tpu_custom_call.1} parent=11 // pred_check
          %p241 = pneg %p104
        $region18: #{tpu_custom_call.1} parent=11 // pred_check_branch
          %243 = sbr.rel (%p241) target = $region20
        $region19: #{tpu_custom_call.1} parent=11 // pred_region
          _
        $region20: #{tpu_custom_call.1} parent=11 // pred_fallthru
          _
        // Predicated region
        $region21: #{tpu_custom_call.1} parent=11 // pred_check
          %p244 = pneg %p125
        $region22: #{tpu_custom_call.1} parent=11 // pred_check_branch
          %246 = sbr.rel (%p244) target = $region24
        $region23: #{tpu_custom_call.1} parent=11 // pred_region
          _
        $region24: #{tpu_custom_call.1} parent=11 // pred_fallthru
          _
        // Predicated region
        $region25: #{tpu_custom_call.1} parent=11 // pred_check
          %p247 = pneg %p146
        $region26: #{tpu_custom_call.1} parent=11 // pred_check_branch
          %249 = sbr.rel (%p247) target = $region28
        $region27: #{tpu_custom_call.1} parent=11 // pred_region
          _
        $region28: #{tpu_custom_call.1} parent=11 // pred_fallthru
          _
        // Predicated region
        $region29: #{tpu_custom_call.1} parent=11 // pred_check
          %p250 = pneg %p167
        $region30: #{tpu_custom_call.1} parent=11 // pred_check_branch
          %252 = sbr.rel (%p250) target = $region32
        $region31: #{tpu_custom_call.1} parent=11 // pred_region
          _
        $region32: #{tpu_custom_call.1} parent=11 // pred_fallthru
          _
      $region12: #{tpu_custom_call.1} parent=5 // pred_fallthru
        _
      %p253 = scmp.lt.s32.totalorder %s24, 2
      // Predicated region
      $region33: #{tpu_custom_call.1} parent=5 // pred_check
        %p254 = pneg %p253
      $region34: #{tpu_custom_call.1} parent=5 // pred_check_branch
        %256 = sbr.rel (%p254) target = $region36
      $region35: #{tpu_custom_call.1} parent=5 // pred_region
        // Predicated region
        $region37: #{tpu_custom_call.1} parent=35 // pred_check
          %p257 = pneg %p56
        $region38: #{tpu_custom_call.1} parent=35 // pred_check_branch
          %259 = sbr.rel (%p257) target = $region40
        $region39: #{tpu_custom_call.1} parent=35 // pred_region
          %s260 = sand.u32 %s46, 1
          %s261 = scalar_lea.sflag [#allocation7], %s260
          %s262 = sand.u32 %s46, 1
          %s263 = smul.addr %s262, 32
          %s264 = scalar_lea.vmem [#allocation6], %s263
          %266 = vsyncadd %s261, 0
          %s267 = smul.addr %s31, 4
          %s268 = smul.addr %s267, 8
          %s269 = scalar_lea.hbm %s0, %s268
          %s270 = sshll.u32 %s269, 4
          %s271 = int_to_ptr.hbm [resolvable:$true] %s270
          %s272 = sshll.u32 %s264, 4
          %s273 = int_to_ptr.vmem [resolvable:$true] %s272
          %278 = dma.hbm_to_vmem [thread:$0]  %s271, 512, %s273, %s261, 256, 256, 16
        $region40: #{tpu_custom_call.1} parent=35 // pred_fallthru
          _
      $region36: #{tpu_custom_call.1} parent=5 // pred_fallthru
        _
      %p279 = scmp.le.s32.totalorder 1, %s24
      %p280 = scmp.lt.s32.totalorder %s24, 3
      %p281 = pnand %p279, %p280
      %p282 = pneg %p281
      // Predicated region
      $region41: #{tpu_custom_call.1} parent=5 // pred_check
        _
      $region42: #{tpu_custom_call.1} parent=5 // pred_check_branch
        %284 = sbr.rel (%p281) target = $region44
      $region43: #{tpu_custom_call.1} parent=5 // pred_region
        %s285 = ssub.s32 %s24, 1
        %s286 = sand.u32 %s49, 1
        %s287 = scalar_lea.sflag [#allocation7], %s286
        %s288 = sand.u32 %s49, 1
        %s289 = smul.addr %s288, 32
        %s290 = scalar_lea.vmem [#allocation6], %s289
        // Predicated region
        $region45: #{tpu_custom_call.1} parent=43 // pred_check
          %p291 = pneg %p62
        $region46: #{tpu_custom_call.1} parent=43 // pred_check_branch
          %293 = sbr.rel (%p291) target = $region48
        $region47: #{tpu_custom_call.1} parent=43 // pred_region
          %295 = dma.done %s287, 512
        $region48: #{tpu_custom_call.1} parent=43 // pred_fallthru
          _
        %s296 = sand.u32 %s49, 1
        %s297 = scalar_lea.sflag [#allocation7], %s296
        %s298 = sand.u32 %s49, 1
        %s299 = smul.addr %s298, 32
        %s300 = scalar_lea.vmem [#allocation6], %s299
        %p301 = pneg %p62
        %p302 = pneg %p59
        %p303 = pneg %p83
        %p304 = pneg %p80
        %p305 = pneg %p104
        %p306 = pneg %p101
        %p307 = pneg %p125
        %p308 = pneg %p122
        %p309 = pneg %p146
        %p310 = pneg %p143
        %p311 = pneg %p167
        %p312 = pneg %p164
        %p313 = pneg %p195
        %p314 = pneg %p192
        %s315 = sand.u32 %s182, 1
        %s316 = scalar_lea.sflag [#allocation8], %s315
        %s317 = sand.u32 %s182, 1
        %s318 = smul.addr %s317, 32
        %s319 = scalar_lea.vmem [#allocation9], %s318
        %p320 = pneg %p223
        %p321 = pneg %p220
        %s322 = sand.u32 %s210, 1
        %s323 = scalar_lea.sflag [#allocation11], %s322
        %s324 = sand.u32 %s210, 1
        %s325 = smul.addr %s324, 512
        %s326 = scalar_lea.vmem [#allocation10], %s325
        %s327 = smul.u32 2, %s34
        %s328 = smul.u32 32, %s34
        %p330 = scmp.eq.s32.totalorder %s34, 0
        // Predicated region
        $region49: #{tpu_custom_call.1} parent=43 // pred_check
          %p331 = pneg %p330
        $region50: #{tpu_custom_call.1} parent=43 // pred_check_branch
          %333 = sbr.rel (%p331) target = $region52
        $region51: #{tpu_custom_call.1} parent=43 // pred_region
          %v334 = vld [vmem:[%s290] sm:$0xff]
          %v335 = vld [vmem:[%s290 + $0x8] sm:$0xff]
          %v336 = vld [vmem:[%s290 + $0x10] sm:$0xff]
          %v337 = vld [vmem:[%s290 + $0x18] sm:$0xff]
          %v338 = vpack.c.bf16 %v336, %v334
          %v339 = vpack.c.bf16 %v337, %v335
          %v340 = vld [vmem:[%s1] sm:$0xf]
          %v341 = vld [vmem:[%s1 + $0x4] sm:$0xf]
          %v344 = vunpack.c.l.b16 %v340
          %v345 = vunpack.c.l.b16 %v341
          %v346 = vpack.c.b16 %v345, %v344
          %vm347 = vcmask 130048
          %v349 = vsel %vm347, %v346, 0
          %351 = vmatpush.bf16.msra.mxu0 0
          %352 = vmatpush.bf16.msra.mxu0 0
          %353 = vmatpush.bf16.msra.mxu0 0
          %354 = vmatpush.bf16.msra.mxu0 0
          %355 = vmatpush.bf16.msra.mxu0 0
          %356 = vmatpush.bf16.msra.mxu0 0
          %357 = vmatpush.bf16.msra.mxu0 0
          %358 = vmatpush.bf16.msra.mxu0 %v338
          %359 = vmatmul.bf16.gmra.mxu0 %v349
          %v360 = vpop.f32.mrf.mxu0
          %v361 = vadd.f32 0.0, %v360
          %v362 = vpop.f32.mrf.mxu0
          %v363 = vadd.f32 0.0, %v362
          %364 = vdwg.mxu0
          %365 = vmatpush.bf16.msra.mxu0 0
          %366 = vmatpush.bf16.msra.mxu0 0
          %367 = vmatpush.bf16.msra.mxu0 0
          %368 = vmatpush.bf16.msra.mxu0 0
          %369 = vmatpush.bf16.msra.mxu0 0
          %370 = vmatpush.bf16.msra.mxu0 0
          %371 = vmatpush.bf16.msra.mxu0 0
          %372 = vmatpush.bf16.msra.mxu0 %v339
          %373 = vmatmul.bf16.gmra.mxu0 %v349
          %v374 = vpop.f32.mrf.mxu0
          %v375 = vadd.f32 0.0, %v374
          %v376 = vpop.f32.mrf.mxu0
          %v377 = vadd.f32 0.0, %v376
          %378 = vdwg.mxu0
          %v379 = vpack.c.bf16 %v375, %v361
          %v380 = vpack.c.bf16 %v377, %v363
          %381 = vst [vmem:[#allocation2] sm:$0xff] %v379
          %382 = vst [vmem:[#allocation2 + $0x8] sm:$0xff] %v380
          %v383 = vld [vmem:[%s3] sm:$0xf]
          %v384 = vld [vmem:[%s3 + $0x4] sm:$0xf]
          %v385 = vld [vmem:[%s4] sm:$0xff]
          %v386 = vld [vmem:[%s4 + $0x8] sm:$0xff]
          %388 = vset.pattern.permute.xlu0 0
          %389 = vperm.xlu0 %388, %v385
          %v390 = vpop.permute.xlu0 %389
          %393 = vset.pattern.permute.xlu0 0
          %394 = vperm.xlu0 %393, %v386
          %v395 = vpop.permute.xlu0 %394
          %v399 = vunpack.c.l.b16 %v383
          %v400 = vunpack.c.l.b16 %v384
          %v401 = vpack.c.b16 %v400, %v399
          %v403 = vsel %vm347, %v401, 0
          %405 = vmatpush.bf16.msra.mxu0 0
          %406 = vmatpush.bf16.msra.mxu0 0
          %407 = vmatpush.bf16.msra.mxu0 0
          %408 = vmatpush.bf16.msra.mxu0 0
          %409 = vmatpush.bf16.msra.mxu0 0
          %410 = vmatpush.bf16.msra.mxu0 0
          %411 = vmatpush.bf16.msra.mxu0 0
          %412 = vmatpush.bf16.msra.mxu0 %v338
          %413 = vmatmul.bf16.gmra.mxu0 %v403
          %v414 = vpop.f32.mrf.mxu0
          %v415 = vadd.f32 %v390, %v414
          %v416 = vpop.f32.mrf.mxu0
          %v417 = vadd.f32 %v395, %v416
          %418 = vdwg.mxu0
          %419 = vmatpush.bf16.msra.mxu0 0
          %420 = vmatpush.bf16.msra.mxu0 0
          %421 = vmatpush.bf16.msra.mxu0 0
          %422 = vmatpush.bf16.msra.mxu0 0
          %423 = vmatpush.bf16.msra.mxu0 0
          %424 = vmatpush.bf16.msra.mxu0 0
          %425 = vmatpush.bf16.msra.mxu0 0
          %426 = vmatpush.bf16.msra.mxu0 %v339
          %427 = vmatmul.bf16.gmra.mxu0 %v403
          %v428 = vpop.f32.mrf.mxu0
          %v429 = vadd.f32 %v390, %v428
          %v430 = vpop.f32.mrf.mxu0
          %v431 = vadd.f32 %v395, %v430
          %432 = vdwg.mxu0
          %v433 = vpack.c.bf16 %v429, %v415
          %v434 = vpack.c.bf16 %v431, %v417
          %435 = vst [vmem:[#allocation3] sm:$0xff] %v433
          %436 = vst [vmem:[#allocation3 + $0x8] sm:$0xff] %v434
          %v437 = vld [vmem:[%s2] sm:$0x1]
          %v439 = vsel %vm347, %v437, 0
          %441 = vmatpush.bf16.msra.mxu0 0
          %442 = vmatpush.bf16.msra.mxu0 0
          %443 = vmatpush.bf16.msra.mxu0 0
          %444 = vmatpush.bf16.msra.mxu0 0
          %445 = vmatpush.bf16.msra.mxu0 0
          %446 = vmatpush.bf16.msra.mxu0 0
          %447 = vmatpush.bf16.msra.mxu0 0
          %448 = vmatpush.bf16.msra.mxu0 %v338
          %449 = vmatmul.bf16.gmra.mxu0 %v439
          %v450 = vpop.f32.mrf.mxu0
          %v451 = vadd.f32 0.0, %v450
          %v452 = vpop.f32.mrf.mxu0
          %453 = vdwg.mxu0
          %454 = vmatpush.bf16.msra.mxu0 0
          %455 = vmatpush.bf16.msra.mxu0 0
          %456 = vmatpush.bf16.msra.mxu0 0
          %457 = vmatpush.bf16.msra.mxu0 0
          %458 = vmatpush.bf16.msra.mxu0 0
          %459 = vmatpush.bf16.msra.mxu0 0
          %460 = vmatpush.bf16.msra.mxu0 0
          %461 = vmatpush.bf16.msra.mxu0 %v339
          %462 = vmatmul.bf16.gmra.mxu0 %v439
          %v463 = vpop.f32.mrf.mxu0
          %v464 = vadd.f32 0.0, %v463
          %v465 = vpop.f32.mrf.mxu0
          %466 = vdwg.mxu0
          %v469 = vrot.slane %v464, 7
          %vm470 = vcmask 1040384
          %v471 = vsel %vm470, %v451, %v469
          %v473 = vlaneseq
          %vm474 = vcmp.ge.s32.totalorder %v473, 0
          %vm475 = vcmp.lt.s32.totalorder %v473, 256
          %vm476 = vmand %vm474, %vm475
          %477 = vst.msk [vmem:[#allocation4] sm:$0x3] %vm476, %v471
        $region52: #{tpu_custom_call.1} parent=43 // pred_fallthru
          _
        %v478 = vld [vmem:[%s290] sm:$0xff]
        %v479 = vld [vmem:[%s290 + $0x8] sm:$0xff]
        %v480 = vld [vmem:[%s290 + $0x10] sm:$0xff]
        %v481 = vld [vmem:[%s290 + $0x18] sm:$0xff]
        %v482 = vpack.c.bf16 %v480, %v478
        %v483 = vpack.c.bf16 %v481, %v479
        %v484 = vld [vmem:[#allocation2] sm:$0xff]
        %v485 = vld [vmem:[#allocation2 + $0x8] sm:$0xff]
        %v486 = vld [vmem:[#allocation4] sm:$0x3]
        %v488 = vperm.slane %v486, 0
        %v489 = vperm.slane %v486, 1
        %492 = vxpose.binary.xlu0.c.b16.start [1/16] %v483, %v482, 128
        %493 = vxpose.binary.xlu0.c.b16.cont [2/16] 0, 0, 128
        %494 = vxpose.binary.xlu0.c.b16.cont [3/16] 0, 0, 128
        %495 = vxpose.binary.xlu0.c.b16.cont [4/16] 0, 0, 128
        %496 = vxpose.binary.xlu0.c.b16.cont [5/16] 0, 0, 128
        %497 = vxpose.binary.xlu0.c.b16.cont [6/16] 0, 0, 128
        %498 = vxpose.binary.xlu0.c.b16.cont [7/16] 0, 0, 128
        %499 = vxpose.binary.xlu0.c.b16.end [8/16] 0, 0, 128
        %v500 = vpop.trf.xlu0
        %v501 = vpop.trf.xlu0
        %v502 = vpop.trf.xlu0
        %v503 = vpop.trf.xlu0
        %v504 = vpop.trf.xlu0
        %v505 = vpop.trf.xlu0
        %v506 = vpop.trf.xlu0
        %v507 = vpop.trf.xlu0
        %v508 = vpop.trf.xlu0
        %v509 = vpop.trf.xlu0
        %v510 = vpop.trf.xlu0
        %v511 = vpop.trf.xlu0
        %v512 = vpop.trf.xlu0
        %v513 = vpop.trf.xlu0
        %v514 = vpop.trf.xlu0
        %v515 = vpop.trf.xlu0
        %v518 = vunpack.c.l.b16 %v484
        %v519 = vunpack.c.h.b16 %v484
        %v520 = vunpack.c.l.b16 %v485
        %v521 = vunpack.c.h.b16 %v485
        %v522 = vpack.c.b16 %v520, %v518
        %v523 = vpack.c.b16 %v521, %v519
        %vm526 = vcmask 130048
        %v528 = vsel %vm526, %v500, 0
        %v531 = vsel %vm526, %v502, 0
        %v534 = vsel %vm526, %v504, 0
        %v537 = vsel %vm526, %v506, 0
        %v540 = vsel %vm526, %v508, 0
        %v543 = vsel %vm526, %v510, 0
        %v546 = vsel %vm526, %v512, 0
        %v549 = vsel %vm526, %v514, 0
        %v552 = vsel %vm526, %v501, 0
        %v555 = vsel %vm526, %v503, 0
        %v558 = vsel %vm526, %v505, 0
        %v561 = vsel %vm526, %v507, 0
        %v564 = vsel %vm526, %v509, 0
        %v567 = vsel %vm526, %v511, 0
        %v570 = vsel %vm526, %v513, 0
        %v573 = vsel %vm526, %v515, 0
        %575 = vmatpush.bf16.msra.mxu0 0
        %576 = vmatpush.bf16.msra.mxu0 0
        %577 = vmatpush.bf16.msra.mxu0 0
        %578 = vmatpush.bf16.msra.mxu0 0
        %579 = vmatpush.bf16.msra.mxu0 0
        %580 = vmatpush.bf16.msra.mxu0 0
        %581 = vmatpush.bf16.msra.mxu0 0
        %582 = vmatpush.bf16.msra.mxu0 %v522
        %583 = vmatmul.bf16.gmra.mxu0 %v528
        %v584 = vpop.f32.mrf.mxu0
        %v585 = vadd.f32 %v488, %v584
        %v586 = vpop.f32.mrf.mxu0
        %v587 = vadd.f32 %v488, %v586
        %588 = vmatmul.bf16.gmra.mxu0 %v531
        %v589 = vpop.f32.mrf.mxu0
        %v590 = vadd.f32 %v488, %v589
        %v591 = vpop.f32.mrf.mxu0
        %v592 = vadd.f32 %v488, %v591
        %593 = vmatmul.bf16.gmra.mxu0 %v534
        %v594 = vpop.f32.mrf.mxu0
        %v595 = vadd.f32 %v488, %v594
        %v596 = vpop.f32.mrf.mxu0
        %v597 = vadd.f32 %v488, %v596
        %598 = vmatmul.bf16.gmra.mxu0 %v537
        %v599 = vpop.f32.mrf.mxu0
        %v600 = vadd.f32 %v488, %v599
        %v601 = vpop.f32.mrf.mxu0
        %v602 = vadd.f32 %v488, %v601
        %603 = vmatmul.bf16.gmra.mxu0 %v540
        %v604 = vpop.f32.mrf.mxu0
        %v605 = vadd.f32 %v488, %v604
        %v606 = vpop.f32.mrf.mxu0
        %v607 = vadd.f32 %v488, %v606
        %608 = vmatmul.bf16.gmra.mxu0 %v543
        %v609 = vpop.f32.mrf.mxu0
        %v610 = vadd.f32 %v488, %v609
        %v611 = vpop.f32.mrf.mxu0
        %v612 = vadd.f32 %v488, %v611
        %613 = vmatmul.bf16.gmra.mxu0 %v546
        %v614 = vpop.f32.mrf.mxu0
        %v615 = vadd.f32 %v488, %v614
        %v616 = vpop.f32.mrf.mxu0
        %v617 = vadd.f32 %v488, %v616
        %618 = vmatmul.bf16.gmra.mxu0 %v549
        %v619 = vpop.f32.mrf.mxu0
        %v620 = vadd.f32 %v488, %v619
        %v621 = vpop.f32.mrf.mxu0
        %v622 = vadd.f32 %v488, %v621
        %623 = vmatmul.bf16.gmra.mxu0 %v552
        %v624 = vpop.f32.mrf.mxu0
        %v625 = vadd.f32 %v488, %v624
        %v626 = vpop.f32.mrf.mxu0
        %v627 = vadd.f32 %v488, %v626
        %628 = vmatmul.bf16.gmra.mxu0 %v555
        %v629 = vpop.f32.mrf.mxu0
        %v630 = vadd.f32 %v488, %v629
        %v631 = vpop.f32.mrf.mxu0
        %v632 = vadd.f32 %v488, %v631
        %633 = vmatmul.bf16.gmra.mxu0 %v558
        %v634 = vpop.f32.mrf.mxu0
        %v635 = vadd.f32 %v488, %v634
        %v636 = vpop.f32.mrf.mxu0
        %v637 = vadd.f32 %v488, %v636
        %638 = vmatmul.bf16.gmra.mxu0 %v561
        %v639 = vpop.f32.mrf.mxu0
        %v640 = vadd.f32 %v488, %v639
        %v641 = vpop.f32.mrf.mxu0
        %v642 = vadd.f32 %v488, %v641
        %643 = vmatmul.bf16.gmra.mxu0 %v564
        %v644 = vpop.f32.mrf.mxu0
        %v645 = vadd.f32 %v488, %v644
        %v646 = vpop.f32.mrf.mxu0
        %v647 = vadd.f32 %v488, %v646
        %648 = vmatmul.bf16.gmra.mxu0 %v567
        %v649 = vpop.f32.mrf.mxu0
        %v650 = vadd.f32 %v488, %v649
        %v651 = vpop.f32.mrf.mxu0
        %v652 = vadd.f32 %v488, %v651
        %653 = vmatmul.bf16.gmra.mxu0 %v570
        %v654 = vpop.f32.mrf.mxu0
        %v655 = vadd.f32 %v488, %v654
        %v656 = vpop.f32.mrf.mxu0
        %v657 = vadd.f32 %v488, %v656
        %658 = vmatmul.bf16.gmra.mxu0 %v573
        %v659 = vpop.f32.mrf.mxu0
        %v660 = vadd.f32 %v488, %v659
        %v661 = vpop.f32.mrf.mxu0
        %v662 = vadd.f32 %v488, %v661
        %663 = vdwg.mxu0
        %664 = vmatpush.bf16.msra.mxu0 0
        %665 = vmatpush.bf16.msra.mxu0 0
        %666 = vmatpush.bf16.msra.mxu0 0
        %667 = vmatpush.bf16.msra.mxu0 0
        %668 = vmatpush.bf16.msra.mxu0 0
        %669 = vmatpush.bf16.msra.mxu0 0
        %670 = vmatpush.bf16.msra.mxu0 0
        %671 = vmatpush.bf16.msra.mxu0 %v523
        %672 = vmatmul.bf16.gmra.mxu0 %v528
        %v673 = vpop.f32.mrf.mxu0
        %v674 = vadd.f32 %v489, %v673
        %v675 = vpop.f32.mrf.mxu0
        %v676 = vadd.f32 %v489, %v675
        %677 = vmatmul.bf16.gmra.mxu0 %v531
        %v678 = vpop.f32.mrf.mxu0
        %v679 = vadd.f32 %v489, %v678
        %v680 = vpop.f32.mrf.mxu0
        %v681 = vadd.f32 %v489, %v680
        %682 = vmatmul.bf16.gmra.mxu0 %v534
        %v683 = vpop.f32.mrf.mxu0
        %v684 = vadd.f32 %v489, %v683
        %v685 = vpop.f32.mrf.mxu0
        %v686 = vadd.f32 %v489, %v685
        %687 = vmatmul.bf16.gmra.mxu0 %v537
        %v688 = vpop.f32.mrf.mxu0
        %v689 = vadd.f32 %v489, %v688
        %v690 = vpop.f32.mrf.mxu0
        %v691 = vadd.f32 %v489, %v690
        %692 = vmatmul.bf16.gmra.mxu0 %v540
        %v693 = vpop.f32.mrf.mxu0
        %v694 = vadd.f32 %v489, %v693
        %v695 = vpop.f32.mrf.mxu0
        %v696 = vadd.f32 %v489, %v695
        %697 = vmatmul.bf16.gmra.mxu0 %v543
        %v698 = vpop.f32.mrf.mxu0
        %v699 = vadd.f32 %v489, %v698
        %v700 = vpop.f32.mrf.mxu0
        %v701 = vadd.f32 %v489, %v700
        %702 = vmatmul.bf16.gmra.mxu0 %v546
        %v703 = vpop.f32.mrf.mxu0
        %v704 = vadd.f32 %v489, %v703
        %v705 = vpop.f32.mrf.mxu0
        %v706 = vadd.f32 %v489, %v705
        %707 = vmatmul.bf16.gmra.mxu0 %v549
        %v708 = vpop.f32.mrf.mxu0
        %v709 = vadd.f32 %v489, %v708
        %v710 = vpop.f32.mrf.mxu0
        %v711 = vadd.f32 %v489, %v710
        %712 = vmatmul.bf16.gmra.mxu0 %v552
        %v713 = vpop.f32.mrf.mxu0
        %v714 = vadd.f32 %v489, %v713
        %v715 = vpop.f32.mrf.mxu0
        %v716 = vadd.f32 %v489, %v715
        %717 = vmatmul.bf16.gmra.mxu0 %v555
        %v718 = vpop.f32.mrf.mxu0
        %v719 = vadd.f32 %v489, %v718
        %v720 = vpop.f32.mrf.mxu0
        %v721 = vadd.f32 %v489, %v720
        %722 = vmatmul.bf16.gmra.mxu0 %v558
        %v723 = vpop.f32.mrf.mxu0
        %v724 = vadd.f32 %v489, %v723
        %v725 = vpop.f32.mrf.mxu0
        %v726 = vadd.f32 %v489, %v725
        %727 = vmatmul.bf16.gmra.mxu0 %v561
        %v728 = vpop.f32.mrf.mxu0
        %v729 = vadd.f32 %v489, %v728
        %v730 = vpop.f32.mrf.mxu0
        %v731 = vadd.f32 %v489, %v730
        %732 = vmatmul.bf16.gmra.mxu0 %v564
        %v733 = vpop.f32.mrf.mxu0
        %v734 = vadd.f32 %v489, %v733
        %v735 = vpop.f32.mrf.mxu0
        %v736 = vadd.f32 %v489, %v735
        %737 = vmatmul.bf16.gmra.mxu0 %v567
        %v738 = vpop.f32.mrf.mxu0
        %v739 = vadd.f32 %v489, %v738
        %v740 = vpop.f32.mrf.mxu0
        %v741 = vadd.f32 %v489, %v740
        %742 = vmatmul.bf16.gmra.mxu0 %v570
        %v743 = vpop.f32.mrf.mxu0
        %v744 = vadd.f32 %v489, %v743
        %v745 = vpop.f32.mrf.mxu0
        %v746 = vadd.f32 %v489, %v745
        %747 = vmatmul.bf16.gmra.mxu0 %v573
        %v748 = vpop.f32.mrf.mxu0
        %v749 = vadd.f32 %v489, %v748
        %v750 = vpop.f32.mrf.mxu0
        %v751 = vadd.f32 %v489, %v750
        %752 = vdwg.mxu0
        %v753 = vmax.f32 %v585, %v674
        %754 = vmax.xlane.f32.xlu0 %v753
        %v755 = vpop.xlane.xlu0 %754
        %v756 = vmax.f32 %v587, %v676
        %757 = vmax.xlane.f32.xlu0 %v756
        %v758 = vpop.xlane.xlu0 %757
        %v759 = vmax.f32 %v590, %v679
        %760 = vmax.xlane.f32.xlu0 %v759
        %v761 = vpop.xlane.xlu0 %760
        %v762 = vmax.f32 %v592, %v681
        %763 = vmax.xlane.f32.xlu0 %v762
        %v764 = vpop.xlane.xlu0 %763
        %v765 = vmax.f32 %v595, %v684
        %766 = vmax.xlane.f32.xlu0 %v765
        %v767 = vpop.xlane.xlu0 %766
        %v768 = vmax.f32 %v597, %v686
        %769 = vmax.xlane.f32.xlu0 %v768
        %v770 = vpop.xlane.xlu0 %769
        %v771 = vmax.f32 %v600, %v689
        %772 = vmax.xlane.f32.xlu0 %v771
        %v773 = vpop.xlane.xlu0 %772
        %v774 = vmax.f32 %v602, %v691
        %775 = vmax.xlane.f32.xlu0 %v774
        %v776 = vpop.xlane.xlu0 %775
        %v777 = vmax.f32 %v605, %v694
        %778 = vmax.xlane.f32.xlu0 %v777
        %v779 = vpop.xlane.xlu0 %778
        %v780 = vmax.f32 %v607, %v696
        %781 = vmax.xlane.f32.xlu0 %v780
        %v782 = vpop.xlane.xlu0 %781
        %v783 = vmax.f32 %v610, %v699
        %784 = vmax.xlane.f32.xlu0 %v783
        %v785 = vpop.xlane.xlu0 %784
        %v786 = vmax.f32 %v612, %v701
        %787 = vmax.xlane.f32.xlu0 %v786
        %v788 = vpop.xlane.xlu0 %787
        %v789 = vmax.f32 %v615, %v704
        %790 = vmax.xlane.f32.xlu0 %v789
        %v791 = vpop.xlane.xlu0 %790
        %v792 = vmax.f32 %v617, %v706
        %793 = vmax.xlane.f32.xlu0 %v792
        %v794 = vpop.xlane.xlu0 %793
        %v795 = vmax.f32 %v620, %v709
        %796 = vmax.xlane.f32.xlu0 %v795
        %v797 = vpop.xlane.xlu0 %796
        %v798 = vmax.f32 %v622, %v711
        %799 = vmax.xlane.f32.xlu0 %v798
        %v800 = vpop.xlane.xlu0 %799
        %v801 = vmax.f32 %v625, %v714
        %802 = vmax.xlane.f32.xlu0 %v801
        %v803 = vpop.xlane.xlu0 %802
        %v804 = vmax.f32 %v627, %v716
        %805 = vmax.xlane.f32.xlu0 %v804
        %v806 = vpop.xlane.xlu0 %805
        %v807 = vmax.f32 %v630, %v719
        %808 = vmax.xlane.f32.xlu0 %v807
        %v809 = vpop.xlane.xlu0 %808
        %v810 = vmax.f32 %v632, %v721
        %811 = vmax.xlane.f32.xlu0 %v810
        %v812 = vpop.xlane.xlu0 %811
        %v813 = vmax.f32 %v635, %v724
        %814 = vmax.xlane.f32.xlu0 %v813
        %v815 = vpop.xlane.xlu0 %814
        %v816 = vmax.f32 %v637, %v726
        %817 = vmax.xlane.f32.xlu0 %v816
        %v818 = vpop.xlane.xlu0 %817
        %v819 = vmax.f32 %v640, %v729
        %820 = vmax.xlane.f32.xlu0 %v819
        %v821 = vpop.xlane.xlu0 %820
        %v822 = vmax.f32 %v642, %v731
        %823 = vmax.xlane.f32.xlu0 %v822
        %v824 = vpop.xlane.xlu0 %823
        %v825 = vmax.f32 %v645, %v734
        %826 = vmax.xlane.f32.xlu0 %v825
        %v827 = vpop.xlane.xlu0 %826
        %v828 = vmax.f32 %v647, %v736
        %829 = vmax.xlane.f32.xlu0 %v828
        %v830 = vpop.xlane.xlu0 %829
        %v831 = vmax.f32 %v650, %v739
        %832 = vmax.xlane.f32.xlu0 %v831
        %v833 = vpop.xlane.xlu0 %832
        %v834 = vmax.f32 %v652, %v741
        %835 = vmax.xlane.f32.xlu0 %v834
        %v836 = vpop.xlane.xlu0 %835
        %v837 = vmax.f32 %v655, %v744
        %838 = vmax.xlane.f32.xlu0 %v837
        %v839 = vpop.xlane.xlu0 %838
        %v840 = vmax.f32 %v657, %v746
        %841 = vmax.xlane.f32.xlu0 %v840
        %v842 = vpop.xlane.xlu0 %841
        %v843 = vmax.f32 %v660, %v749
        %844 = vmax.xlane.f32.xlu0 %v843
        %v845 = vpop.xlane.xlu0 %844
        %v846 = vmax.f32 %v662, %v751
        %847 = vmax.xlane.f32.xlu0 %v846
        %v848 = vpop.xlane.xlu0 %847
        %v849 = vsub.f32 %v585, %v755
        %v850 = vsub.f32 %v674, %v755
        %v851 = vsub.f32 %v587, %v758
        %v852 = vsub.f32 %v676, %v758
        %v853 = vsub.f32 %v590, %v761
        %v854 = vsub.f32 %v679, %v761
        %v855 = vsub.f32 %v592, %v764
        %v856 = vsub.f32 %v681, %v764
        %v857 = vsub.f32 %v595, %v767
        %v858 = vsub.f32 %v684, %v767
        %v859 = vsub.f32 %v597, %v770
        %v860 = vsub.f32 %v686, %v770
        %v861 = vsub.f32 %v600, %v773
        %v862 = vsub.f32 %v689, %v773
        %v863 = vsub.f32 %v602, %v776
        %v864 = vsub.f32 %v691, %v776
        %v865 = vsub.f32 %v605, %v779
        %v866 = vsub.f32 %v694, %v779
        %v867 = vsub.f32 %v607, %v782
        %v868 = vsub.f32 %v696, %v782
        %v869 = vsub.f32 %v610, %v785
        %v870 = vsub.f32 %v699, %v785
        %v871 = vsub.f32 %v612, %v788
        %v872 = vsub.f32 %v701, %v788
        %v873 = vsub.f32 %v615, %v791
        %v874 = vsub.f32 %v704, %v791
        %v875 = vsub.f32 %v617, %v794
        %v876 = vsub.f32 %v706, %v794
        %v877 = vsub.f32 %v620, %v797
        %v878 = vsub.f32 %v709, %v797
        %v879 = vsub.f32 %v622, %v800
        %v880 = vsub.f32 %v711, %v800
        %v881 = vsub.f32 %v625, %v803
        %v882 = vsub.f32 %v714, %v803
        %v883 = vsub.f32 %v627, %v806
        %v884 = vsub.f32 %v716, %v806
        %v885 = vsub.f32 %v630, %v809
        %v886 = vsub.f32 %v719, %v809
        %v887 = vsub.f32 %v632, %v812
        %v888 = vsub.f32 %v721, %v812
        %v889 = vsub.f32 %v635, %v815
        %v890 = vsub.f32 %v724, %v815
        %v891 = vsub.f32 %v637, %v818
        %v892 = vsub.f32 %v726, %v818
        %v893 = vsub.f32 %v640, %v821
        %v894 = vsub.f32 %v729, %v821
        %v895 = vsub.f32 %v642, %v824
        %v896 = vsub.f32 %v731, %v824
        %v897 = vsub.f32 %v645, %v827
        %v898 = vsub.f32 %v734, %v827
        %v899 = vsub.f32 %v647, %v830
        %v900 = vsub.f32 %v736, %v830
        %v901 = vsub.f32 %v650, %v833
        %v902 = vsub.f32 %v739, %v833
        %v903 = vsub.f32 %v652, %v836
        %v904 = vsub.f32 %v741, %v836
        %v905 = vsub.f32 %v655, %v839
        %v906 = vsub.f32 %v744, %v839
        %v907 = vsub.f32 %v657, %v842
        %v908 = vsub.f32 %v746, %v842
        %v909 = vsub.f32 %v660, %v845
        %v910 = vsub.f32 %v749, %v845
        %v911 = vsub.f32 %v662, %v848
        %v912 = vsub.f32 %v751, %v848
        %v913 = vmul.f32 %v849, 1.442695
        %v914 = vpow.pop %v913
        %v915 = vmul.f32 %v850, 1.442695
        %v916 = vpow.pop %v915
        %v917 = vmul.f32 %v851, 1.442695
        %v918 = vpow.pop %v917
        %v919 = vmul.f32 %v852, 1.442695
        %v920 = vpow.pop %v919
        %v921 = vmul.f32 %v853, 1.442695
        %v922 = vpow.pop %v921
        %v923 = vmul.f32 %v854, 1.442695
        %v924 = vpow.pop %v923
        %v925 = vmul.f32 %v855, 1.442695
        %v926 = vpow.pop %v925
        %v927 = vmul.f32 %v856, 1.442695
        %v928 = vpow.pop %v927
        %v929 = vmul.f32 %v857, 1.442695
        %v930 = vpow.pop %v929
        %v931 = vmul.f32 %v858, 1.442695
        %v932 = vpow.pop %v931
        %v933 = vmul.f32 %v859, 1.442695
        %v934 = vpow.pop %v933
        %v935 = vmul.f32 %v860, 1.442695
        %v936 = vpow.pop %v935
        %v937 = vmul.f32 %v861, 1.442695
        %v938 = vpow.pop %v937
        %v939 = vmul.f32 %v862, 1.442695
        %v940 = vpow.pop %v939
        %v941 = vmul.f32 %v863, 1.442695
        %v942 = vpow.pop %v941
        %v943 = vmul.f32 %v864, 1.442695
        %v944 = vpow.pop %v943
        %v945 = vmul.f32 %v865, 1.442695
        %v946 = vpow.pop %v945
        %v947 = vmul.f32 %v866, 1.442695
        %v948 = vpow.pop %v947
        %v949 = vmul.f32 %v867, 1.442695
        %v950 = vpow.pop %v949
        %v951 = vmul.f32 %v868, 1.442695
        %v952 = vpow.pop %v951
        %v953 = vmul.f32 %v869, 1.442695
        %v954 = vpow.pop %v953
        %v955 = vmul.f32 %v870, 1.442695
        %v956 = vpow.pop %v955
        %v957 = vmul.f32 %v871, 1.442695
        %v958 = vpow.pop %v957
        %v959 = vmul.f32 %v872, 1.442695
        %v960 = vpow.pop %v959
        %v961 = vmul.f32 %v873, 1.442695
        %v962 = vpow.pop %v961
        %v963 = vmul.f32 %v874, 1.442695
        %v964 = vpow.pop %v963
        %v965 = vmul.f32 %v875, 1.442695
        %v966 = vpow.pop %v965
        %v967 = vmul.f32 %v876, 1.442695
        %v968 = vpow.pop %v967
        %v969 = vmul.f32 %v877, 1.442695
        %v970 = vpow.pop %v969
        %v971 = vmul.f32 %v878, 1.442695
        %v972 = vpow.pop %v971
        %v973 = vmul.f32 %v879, 1.442695
        %v974 = vpow.pop %v973
        %v975 = vmul.f32 %v880, 1.442695
        %v976 = vpow.pop %v975
        %v977 = vmul.f32 %v881, 1.442695
        %v978 = vpow.pop %v977
        %v979 = vmul.f32 %v882, 1.442695
        %v980 = vpow.pop %v979
        %v981 = vmul.f32 %v883, 1.442695
        %v982 = vpow.pop %v981
        %v983 = vmul.f32 %v884, 1.442695
        %v984 = vpow.pop %v983
        %v985 = vmul.f32 %v885, 1.442695
        %v986 = vpow.pop %v985
        %v987 = vmul.f32 %v886, 1.442695
        %v988 = vpow.pop %v987
        %v989 = vmul.f32 %v887, 1.442695
        %v990 = vpow.pop %v989
        %v991 = vmul.f32 %v888, 1.442695
        %v992 = vpow.pop %v991
        %v993 = vmul.f32 %v889, 1.442695
        %v994 = vpow.pop %v993
        %v995 = vmul.f32 %v890, 1.442695
        %v996 = vpow.pop %v995
        %v997 = vmul.f32 %v891, 1.442695
        %v998 = vpow.pop %v997
        %v999 = vmul.f32 %v892, 1.442695
        %v1000 = vpow.pop %v999
        %v1001 = vmul.f32 %v893, 1.442695
        %v1002 = vpow.pop %v1001
        %v1003 = vmul.f32 %v894, 1.442695
        %v1004 = vpow.pop %v1003
        %v1005 = vmul.f32 %v895, 1.442695
        %v1006 = vpow.pop %v1005
        %v1007 = vmul.f32 %v896, 1.442695
        %v1008 = vpow.pop %v1007
        %v1009 = vmul.f32 %v897, 1.442695
        %v1010 = vpow.pop %v1009
        %v1011 = vmul.f32 %v898, 1.442695
        %v1012 = vpow.pop %v1011
        %v1013 = vmul.f32 %v899, 1.442695
        %v1014 = vpow.pop %v1013
        %v1015 = vmul.f32 %v900, 1.442695
        %v1016 = vpow.pop %v1015
        %v1017 = vmul.f32 %v901, 1.442695
        %v1018 = vpow.pop %v1017
        %v1019 = vmul.f32 %v902, 1.442695
        %v1020 = vpow.pop %v1019
        %v1021 = vmul.f32 %v903, 1.442695
        %v1022 = vpow.pop %v1021
        %v1023 = vmul.f32 %v904, 1.442695
        %v1024 = vpow.pop %v1023
        %v1025 = vmul.f32 %v905, 1.442695
        %v1026 = vpow.pop %v1025
        %v1027 = vmul.f32 %v906, 1.442695
        %v1028 = vpow.pop %v1027
        %v1029 = vmul.f32 %v907, 1.442695
        %v1030 = vpow.pop %v1029
        %v1031 = vmul.f32 %v908, 1.442695
        %v1032 = vpow.pop %v1031
        %v1033 = vmul.f32 %v909, 1.442695
        %v1034 = vpow.pop %v1033
        %v1035 = vmul.f32 %v910, 1.442695
        %v1036 = vpow.pop %v1035
        %v1037 = vmul.f32 %v911, 1.442695
        %v1038 = vpow.pop %v1037
        %v1039 = vmul.f32 %v912, 1.442695
        %v1040 = vpow.pop %v1039
        %s1041 = sld [smem:[#allocation5]]
        %v1042 = vadd.f32 %v914, %v916
        %1043 = vadd.xlane.f32.xlu0 %v1042
        %v1044 = vpop.xlane.xlu0 %1043
        %v1045 = vadd.f32 %v918, %v920
        %1046 = vadd.xlane.f32.xlu0 %v1045
        %v1047 = vpop.xlane.xlu0 %1046
        %v1048 = vadd.f32 %v922, %v924
        %1049 = vadd.xlane.f32.xlu0 %v1048
        %v1050 = vpop.xlane.xlu0 %1049
        %v1051 = vadd.f32 %v926, %v928
        %1052 = vadd.xlane.f32.xlu0 %v1051
        %v1053 = vpop.xlane.xlu0 %1052
        %v1054 = vadd.f32 %v930, %v932
        %1055 = vadd.xlane.f32.xlu0 %v1054
        %v1056 = vpop.xlane.xlu0 %1055
        %v1057 = vadd.f32 %v934, %v936
        %1058 = vadd.xlane.f32.xlu0 %v1057
        %v1059 = vpop.xlane.xlu0 %1058
        %v1060 = vadd.f32 %v938, %v940
        %1061 = vadd.xlane.f32.xlu0 %v1060
        %v1062 = vpop.xlane.xlu0 %1061
        %v1063 = vadd.f32 %v942, %v944
        %1064 = vadd.xlane.f32.xlu0 %v1063
        %v1065 = vpop.xlane.xlu0 %1064
        %v1066 = vadd.f32 %v946, %v948
        %1067 = vadd.xlane.f32.xlu0 %v1066
        %v1068 = vpop.xlane.xlu0 %1067
        %v1069 = vadd.f32 %v950, %v952
        %1070 = vadd.xlane.f32.xlu0 %v1069
        %v1071 = vpop.xlane.xlu0 %1070
        %v1072 = vadd.f32 %v954, %v956
        %1073 = vadd.xlane.f32.xlu0 %v1072
        %v1074 = vpop.xlane.xlu0 %1073
        %v1075 = vadd.f32 %v958, %v960
        %1076 = vadd.xlane.f32.xlu0 %v1075
        %v1077 = vpop.xlane.xlu0 %1076
        %v1078 = vadd.f32 %v962, %v964
        %1079 = vadd.xlane.f32.xlu0 %v1078
        %v1080 = vpop.xlane.xlu0 %1079
        %v1081 = vadd.f32 %v966, %v968
        %1082 = vadd.xlane.f32.xlu0 %v1081
        %v1083 = vpop.xlane.xlu0 %1082
        %v1084 = vadd.f32 %v970, %v972
        %1085 = vadd.xlane.f32.xlu0 %v1084
        %v1086 = vpop.xlane.xlu0 %1085
        %v1087 = vadd.f32 %v974, %v976
        %1088 = vadd.xlane.f32.xlu0 %v1087
        %v1089 = vpop.xlane.xlu0 %1088
        %v1090 = vadd.f32 %v978, %v980
        %1091 = vadd.xlane.f32.xlu0 %v1090
        %v1092 = vpop.xlane.xlu0 %1091
        %v1093 = vadd.f32 %v982, %v984
        %1094 = vadd.xlane.f32.xlu0 %v1093
        %v1095 = vpop.xlane.xlu0 %1094
        %v1096 = vadd.f32 %v986, %v988
        %1097 = vadd.xlane.f32.xlu0 %v1096
        %v1098 = vpop.xlane.xlu0 %1097
        %v1099 = vadd.f32 %v990, %v992
        %1100 = vadd.xlane.f32.xlu0 %v1099
        %v1101 = vpop.xlane.xlu0 %1100
        %v1102 = vadd.f32 %v994, %v996
        %1103 = vadd.xlane.f32.xlu0 %v1102
        %v1104 = vpop.xlane.xlu0 %1103
        %v1105 = vadd.f32 %v998, %v1000
        %1106 = vadd.xlane.f32.xlu0 %v1105
        %v1107 = vpop.xlane.xlu0 %1106
        %v1108 = vadd.f32 %v1002, %v1004
        %1109 = vadd.xlane.f32.xlu0 %v1108
        %v1110 = vpop.xlane.xlu0 %1109
        %v1111 = vadd.f32 %v1006, %v1008
        %1112 = vadd.xlane.f32.xlu0 %v1111
        %v1113 = vpop.xlane.xlu0 %1112
        %v1114 = vadd.f32 %v1010, %v1012
        %1115 = vadd.xlane.f32.xlu0 %v1114
        %v1116 = vpop.xlane.xlu0 %1115
        %v1117 = vadd.f32 %v1014, %v1016
        %1118 = vadd.xlane.f32.xlu0 %v1117
        %v1119 = vpop.xlane.xlu0 %1118
        %v1120 = vadd.f32 %v1018, %v1020
        %1121 = vadd.xlane.f32.xlu0 %v1120
        %v1122 = vpop.xlane.xlu0 %1121
        %v1123 = vadd.f32 %v1022, %v1024
        %1124 = vadd.xlane.f32.xlu0 %v1123
        %v1125 = vpop.xlane.xlu0 %1124
        %v1126 = vadd.f32 %v1026, %v1028
        %1127 = vadd.xlane.f32.xlu0 %v1126
        %v1128 = vpop.xlane.xlu0 %1127
        %v1129 = vadd.f32 %v1030, %v1032
        %1130 = vadd.xlane.f32.xlu0 %v1129
        %v1131 = vpop.xlane.xlu0 %1130
        %v1132 = vadd.f32 %v1034, %v1036
        %1133 = vadd.xlane.f32.xlu0 %v1132
        %v1134 = vpop.xlane.xlu0 %1133
        %v1135 = vadd.f32 %v1038, %v1040
        %1136 = vadd.xlane.f32.xlu0 %v1135
        %v1137 = vpop.xlane.xlu0 %1136
        %v1138 = vrcp.pop %v1044
        %v1139 = vmul.f32 %v1044, %v1138
        %v1140 = vsub.f32 1.0, %v1139
        %v1141 = vmul.f32 %v1138, %v1140
        %v1142 = vadd.f32 %v1138, %v1141
        %vm1143 = vweird.f32 %v1044
        %vm1144 = vweird.f32 %v1138
        %vm1145 = vmor %vm1143, %vm1144
        %v1146 = vsel %vm1145, %v1138, %v1142
        %v1147 = vand.u32 2147483647, %v1044
        %vm1148 = vcmp.eq.f32.partialorder %v1147, 8.507059e+37
        %v1149 = vand.u32 %v1044, 2147483648
        %v1150 = vor.u32 1.1754944e-38, %v1149
        %v1151 = vsel %vm1148, %v1150, %v1146
        %v1152 = vmul.f32 %v914, %v1151
        %v1153 = vmul.f32 %v916, %v1151
        %v1154 = vrcp.pop %v1047
        %v1155 = vmul.f32 %v1047, %v1154
        %v1156 = vsub.f32 1.0, %v1155
        %v1157 = vmul.f32 %v1154, %v1156
        %v1158 = vadd.f32 %v1154, %v1157
        %vm1159 = vweird.f32 %v1047
        %vm1160 = vweird.f32 %v1154
        %vm1161 = vmor %vm1159, %vm1160
        %v1162 = vsel %vm1161, %v1154, %v1158
        %v1163 = vand.u32 2147483647, %v1047
        %vm1164 = vcmp.eq.f32.partialorder %v1163, 8.507059e+37
        %v1165 = vand.u32 %v1047, 2147483648
        %v1166 = vor.u32 1.1754944e-38, %v1165
        %v1167 = vsel %vm1164, %v1166, %v1162
        %v1168 = vmul.f32 %v918, %v1167
        %v1169 = vmul.f32 %v920, %v1167
        %v1170 = vrcp.pop %v1050
        %v1171 = vmul.f32 %v1050, %v1170
        %v1172 = vsub.f32 1.0, %v1171
        %v1173 = vmul.f32 %v1170, %v1172
        %v1174 = vadd.f32 %v1170, %v1173
        %vm1175 = vweird.f32 %v1050
        %vm1176 = vweird.f32 %v1170
        %vm1177 = vmor %vm1175, %vm1176
        %v1178 = vsel %vm1177, %v1170, %v1174
        %v1179 = vand.u32 2147483647, %v1050
        %vm1180 = vcmp.eq.f32.partialorder %v1179, 8.507059e+37
        %v1181 = vand.u32 %v1050, 2147483648
        %v1182 = vor.u32 1.1754944e-38, %v1181
        %v1183 = vsel %vm1180, %v1182, %v1178
        %v1184 = vmul.f32 %v922, %v1183
        %v1185 = vmul.f32 %v924, %v1183
        %v1186 = vrcp.pop %v1053
        %v1187 = vmul.f32 %v1053, %v1186
        %v1188 = vsub.f32 1.0, %v1187
        %v1189 = vmul.f32 %v1186, %v1188
        %v1190 = vadd.f32 %v1186, %v1189
        %vm1191 = vweird.f32 %v1053
        %vm1192 = vweird.f32 %v1186
        %vm1193 = vmor %vm1191, %vm1192
        %v1194 = vsel %vm1193, %v1186, %v1190
        %v1195 = vand.u32 2147483647, %v1053
        %vm1196 = vcmp.eq.f32.partialorder %v1195, 8.507059e+37
        %v1197 = vand.u32 %v1053, 2147483648
        %v1198 = vor.u32 1.1754944e-38, %v1197
        %v1199 = vsel %vm1196, %v1198, %v1194
        %v1200 = vmul.f32 %v926, %v1199
        %v1201 = vmul.f32 %v928, %v1199
        %v1202 = vrcp.pop %v1056
        %v1203 = vmul.f32 %v1056, %v1202
        %v1204 = vsub.f32 1.0, %v1203
        %v1205 = vmul.f32 %v1202, %v1204
        %v1206 = vadd.f32 %v1202, %v1205
        %vm1207 = vweird.f32 %v1056
        %vm1208 = vweird.f32 %v1202
        %vm1209 = vmor %vm1207, %vm1208
        %v1210 = vsel %vm1209, %v1202, %v1206
        %v1211 = vand.u32 2147483647, %v1056
        %vm1212 = vcmp.eq.f32.partialorder %v1211, 8.507059e+37
        %v1213 = vand.u32 %v1056, 2147483648
        %v1214 = vor.u32 1.1754944e-38, %v1213
        %v1215 = vsel %vm1212, %v1214, %v1210
        %v1216 = vmul.f32 %v930, %v1215
        %v1217 = vmul.f32 %v932, %v1215
        %v1218 = vrcp.pop %v1059
        %v1219 = vmul.f32 %v1059, %v1218
        %v1220 = vsub.f32 1.0, %v1219
        %v1221 = vmul.f32 %v1218, %v1220
        %v1222 = vadd.f32 %v1218, %v1221
        %vm1223 = vweird.f32 %v1059
        %vm1224 = vweird.f32 %v1218
        %vm1225 = vmor %vm1223, %vm1224
        %v1226 = vsel %vm1225, %v1218, %v1222
        %v1227 = vand.u32 2147483647, %v1059
        %vm1228 = vcmp.eq.f32.partialorder %v1227, 8.507059e+37
        %v1229 = vand.u32 %v1059, 2147483648
        %v1230 = vor.u32 1.1754944e-38, %v1229
        %v1231 = vsel %vm1228, %v1230, %v1226
        %v1232 = vmul.f32 %v934, %v1231
        %v1233 = vmul.f32 %v936, %v1231
        %v1234 = vrcp.pop %v1062
        %v1235 = vmul.f32 %v1062, %v1234
        %v1236 = vsub.f32 1.0, %v1235
        %v1237 = vmul.f32 %v1234, %v1236
        %v1238 = vadd.f32 %v1234, %v1237
        %vm1239 = vweird.f32 %v1062
        %vm1240 = vweird.f32 %v1234
        %vm1241 = vmor %vm1239, %vm1240
        %v1242 = vsel %vm1241, %v1234, %v1238
        %v1243 = vand.u32 2147483647, %v1062
        %vm1244 = vcmp.eq.f32.partialorder %v1243, 8.507059e+37
        %v1245 = vand.u32 %v1062, 2147483648
        %v1246 = vor.u32 1.1754944e-38, %v1245
        %v1247 = vsel %vm1244, %v1246, %v1242
        %v1248 = vmul.f32 %v938, %v1247
        %v1249 = vmul.f32 %v940, %v1247
        %v1250 = vrcp.pop %v1065
        %v1251 = vmul.f32 %v1065, %v1250
        %v1252 = vsub.f32 1.0, %v1251
        %v1253 = vmul.f32 %v1250, %v1252
        %v1254 = vadd.f32 %v1250, %v1253
        %vm1255 = vweird.f32 %v1065
        %vm1256 = vweird.f32 %v1250
        %vm1257 = vmor %vm1255, %vm1256
        %v1258 = vsel %vm1257, %v1250, %v1254
        %v1259 = vand.u32 2147483647, %v1065
        %vm1260 = vcmp.eq.f32.partialorder %v1259, 8.507059e+37
        %v1261 = vand.u32 %v1065, 2147483648
        %v1262 = vor.u32 1.1754944e-38, %v1261
        %v1263 = vsel %vm1260, %v1262, %v1258
        %v1264 = vmul.f32 %v942, %v1263
        %v1265 = vmul.f32 %v944, %v1263
        %v1266 = vrcp.pop %v1068
        %v1267 = vmul.f32 %v1068, %v1266
        %v1268 = vsub.f32 1.0, %v1267
        %v1269 = vmul.f32 %v1266, %v1268
        %v1270 = vadd.f32 %v1266, %v1269
        %vm1271 = vweird.f32 %v1068
        %vm1272 = vweird.f32 %v1266
        %vm1273 = vmor %vm1271, %vm1272
        %v1274 = vsel %vm1273, %v1266, %v1270
        %v1275 = vand.u32 2147483647, %v1068
        %vm1276 = vcmp.eq.f32.partialorder %v1275, 8.507059e+37
        %v1277 = vand.u32 %v1068, 2147483648
        %v1278 = vor.u32 1.1754944e-38, %v1277
        %v1279 = vsel %vm1276, %v1278, %v1274
        %v1280 = vmul.f32 %v946, %v1279
        %v1281 = vmul.f32 %v948, %v1279
        %v1282 = vrcp.pop %v1071
        %v1283 = vmul.f32 %v1071, %v1282
        %v1284 = vsub.f32 1.0, %v1283
        %v1285 = vmul.f32 %v1282, %v1284
        %v1286 = vadd.f32 %v1282, %v1285
        %vm1287 = vweird.f32 %v1071
        %vm1288 = vweird.f32 %v1282
        %vm1289 = vmor %vm1287, %vm1288
        %v1290 = vsel %vm1289, %v1282, %v1286
        %v1291 = vand.u32 2147483647, %v1071
        %vm1292 = vcmp.eq.f32.partialorder %v1291, 8.507059e+37
        %v1293 = vand.u32 %v1071, 2147483648
        %v1294 = vor.u32 1.1754944e-38, %v1293
        %v1295 = vsel %vm1292, %v1294, %v1290
        %v1296 = vmul.f32 %v950, %v1295
        %v1297 = vmul.f32 %v952, %v1295
        %v1298 = vrcp.pop %v1074
        %v1299 = vmul.f32 %v1074, %v1298
        %v1300 = vsub.f32 1.0, %v1299
        %v1301 = vmul.f32 %v1298, %v1300
        %v1302 = vadd.f32 %v1298, %v1301
        %vm1303 = vweird.f32 %v1074
        %vm1304 = vweird.f32 %v1298
        %vm1305 = vmor %vm1303, %vm1304
        %v1306 = vsel %vm1305, %v1298, %v1302
        %v1307 = vand.u32 2147483647, %v1074
        %vm1308 = vcmp.eq.f32.partialorder %v1307, 8.507059e+37
        %v1309 = vand.u32 %v1074, 2147483648
        %v1310 = vor.u32 1.1754944e-38, %v1309
        %v1311 = vsel %vm1308, %v1310, %v1306
        %v1312 = vmul.f32 %v954, %v1311
        %v1313 = vmul.f32 %v956, %v1311
        %v1314 = vrcp.pop %v1077
        %v1315 = vmul.f32 %v1077, %v1314
        %v1316 = vsub.f32 1.0, %v1315
        %v1317 = vmul.f32 %v1314, %v1316
        %v1318 = vadd.f32 %v1314, %v1317
        %vm1319 = vweird.f32 %v1077
        %vm1320 = vweird.f32 %v1314
        %vm1321 = vmor %vm1319, %vm1320
        %v1322 = vsel %vm1321, %v1314, %v1318
        %v1323 = vand.u32 2147483647, %v1077
        %vm1324 = vcmp.eq.f32.partialorder %v1323, 8.507059e+37
        %v1325 = vand.u32 %v1077, 2147483648
        %v1326 = vor.u32 1.1754944e-38, %v1325
        %v1327 = vsel %vm1324, %v1326, %v1322
        %v1328 = vmul.f32 %v958, %v1327
        %v1329 = vmul.f32 %v960, %v1327
        %v1330 = vrcp.pop %v1080
        %v1331 = vmul.f32 %v1080, %v1330
        %v1332 = vsub.f32 1.0, %v1331
        %v1333 = vmul.f32 %v1330, %v1332
        %v1334 = vadd.f32 %v1330, %v1333
        %vm1335 = vweird.f32 %v1080
        %vm1336 = vweird.f32 %v1330
        %vm1337 = vmor %vm1335, %vm1336
        %v1338 = vsel %vm1337, %v1330, %v1334
        %v1339 = vand.u32 2147483647, %v1080
        %vm1340 = vcmp.eq.f32.partialorder %v1339, 8.507059e+37
        %v1341 = vand.u32 %v1080, 2147483648
        %v1342 = vor.u32 1.1754944e-38, %v1341
        %v1343 = vsel %vm1340, %v1342, %v1338
        %v1344 = vmul.f32 %v962, %v1343
        %v1345 = vmul.f32 %v964, %v1343
        %v1346 = vrcp.pop %v1083
        %v1347 = vmul.f32 %v1083, %v1346
        %v1348 = vsub.f32 1.0, %v1347
        %v1349 = vmul.f32 %v1346, %v1348
        %v1350 = vadd.f32 %v1346, %v1349
        %vm1351 = vweird.f32 %v1083
        %vm1352 = vweird.f32 %v1346
        %vm1353 = vmor %vm1351, %vm1352
        %v1354 = vsel %vm1353, %v1346, %v1350
        %v1355 = vand.u32 2147483647, %v1083
        %vm1356 = vcmp.eq.f32.partialorder %v1355, 8.507059e+37
        %v1357 = vand.u32 %v1083, 2147483648
        %v1358 = vor.u32 1.1754944e-38, %v1357
        %v1359 = vsel %vm1356, %v1358, %v1354
        %v1360 = vmul.f32 %v966, %v1359
        %v1361 = vmul.f32 %v968, %v1359
        %v1362 = vrcp.pop %v1086
        %v1363 = vmul.f32 %v1086, %v1362
        %v1364 = vsub.f32 1.0, %v1363
        %v1365 = vmul.f32 %v1362, %v1364
        %v1366 = vadd.f32 %v1362, %v1365
        %vm1367 = vweird.f32 %v1086
        %vm1368 = vweird.f32 %v1362
        %vm1369 = vmor %vm1367, %vm1368
        %v1370 = vsel %vm1369, %v1362, %v1366
        %v1371 = vand.u32 2147483647, %v1086
        %vm1372 = vcmp.eq.f32.partialorder %v1371, 8.507059e+37
        %v1373 = vand.u32 %v1086, 2147483648
        %v1374 = vor.u32 1.1754944e-38, %v1373
        %v1375 = vsel %vm1372, %v1374, %v1370
        %v1376 = vmul.f32 %v970, %v1375
        %v1377 = vmul.f32 %v972, %v1375
        %v1378 = vrcp.pop %v1089
        %v1379 = vmul.f32 %v1089, %v1378
        %v1380 = vsub.f32 1.0, %v1379
        %v1381 = vmul.f32 %v1378, %v1380
        %v1382 = vadd.f32 %v1378, %v1381
        %vm1383 = vweird.f32 %v1089
        %vm1384 = vweird.f32 %v1378
        %vm1385 = vmor %vm1383, %vm1384
        %v1386 = vsel %vm1385, %v1378, %v1382
        %v1387 = vand.u32 2147483647, %v1089
        %vm1388 = vcmp.eq.f32.partialorder %v1387, 8.507059e+37
        %v1389 = vand.u32 %v1089, 2147483648
        %v1390 = vor.u32 1.1754944e-38, %v1389
        %v1391 = vsel %vm1388, %v1390, %v1386
        %v1392 = vmul.f32 %v974, %v1391
        %v1393 = vmul.f32 %v976, %v1391
        %v1394 = vrcp.pop %v1092
        %v1395 = vmul.f32 %v1092, %v1394
        %v1396 = vsub.f32 1.0, %v1395
        %v1397 = vmul.f32 %v1394, %v1396
        %v1398 = vadd.f32 %v1394, %v1397
        %vm1399 = vweird.f32 %v1092
        %vm1400 = vweird.f32 %v1394
        %vm1401 = vmor %vm1399, %vm1400
        %v1402 = vsel %vm1401, %v1394, %v1398
        %v1403 = vand.u32 2147483647, %v1092
        %vm1404 = vcmp.eq.f32.partialorder %v1403, 8.507059e+37
        %v1405 = vand.u32 %v1092, 2147483648
        %v1406 = vor.u32 1.1754944e-38, %v1405
        %v1407 = vsel %vm1404, %v1406, %v1402
        %v1408 = vmul.f32 %v978, %v1407
        %v1409 = vmul.f32 %v980, %v1407
        %v1410 = vrcp.pop %v1095
        %v1411 = vmul.f32 %v1095, %v1410
        %v1412 = vsub.f32 1.0, %v1411
        %v1413 = vmul.f32 %v1410, %v1412
        %v1414 = vadd.f32 %v1410, %v1413
        %vm1415 = vweird.f32 %v1095
        %vm1416 = vweird.f32 %v1410
        %vm1417 = vmor %vm1415, %vm1416
        %v1418 = vsel %vm1417, %v1410, %v1414
        %v1419 = vand.u32 2147483647, %v1095
        %vm1420 = vcmp.eq.f32.partialorder %v1419, 8.507059e+37
        %v1421 = vand.u32 %v1095, 2147483648
        %v1422 = vor.u32 1.1754944e-38, %v1421
        %v1423 = vsel %vm1420, %v1422, %v1418
        %v1424 = vmul.f32 %v982, %v1423
        %v1425 = vmul.f32 %v984, %v1423
        %v1426 = vrcp.pop %v1098
        %v1427 = vmul.f32 %v1098, %v1426
        %v1428 = vsub.f32 1.0, %v1427
        %v1429 = vmul.f32 %v1426, %v1428
        %v1430 = vadd.f32 %v1426, %v1429
        %vm1431 = vweird.f32 %v1098
        %vm1432 = vweird.f32 %v1426
        %vm1433 = vmor %vm1431, %vm1432
        %v1434 = vsel %vm1433, %v1426, %v1430
        %v1435 = vand.u32 2147483647, %v1098
        %vm1436 = vcmp.eq.f32.partialorder %v1435, 8.507059e+37
        %v1437 = vand.u32 %v1098, 2147483648
        %v1438 = vor.u32 1.1754944e-38, %v1437
        %v1439 = vsel %vm1436, %v1438, %v1434
        %v1440 = vmul.f32 %v986, %v1439
        %v1441 = vmul.f32 %v988, %v1439
        %v1442 = vrcp.pop %v1101
        %v1443 = vmul.f32 %v1101, %v1442
        %v1444 = vsub.f32 1.0, %v1443
        %v1445 = vmul.f32 %v1442, %v1444
        %v1446 = vadd.f32 %v1442, %v1445
        %vm1447 = vweird.f32 %v1101
        %vm1448 = vweird.f32 %v1442
        %vm1449 = vmor %vm1447, %vm1448
        %v1450 = vsel %vm1449, %v1442, %v1446
        %v1451 = vand.u32 2147483647, %v1101
        %vm1452 = vcmp.eq.f32.partialorder %v1451, 8.507059e+37
        %v1453 = vand.u32 %v1101, 2147483648
        %v1454 = vor.u32 1.1754944e-38, %v1453
        %v1455 = vsel %vm1452, %v1454, %v1450
        %v1456 = vmul.f32 %v990, %v1455
        %v1457 = vmul.f32 %v992, %v1455
        %v1458 = vrcp.pop %v1104
        %v1459 = vmul.f32 %v1104, %v1458
        %v1460 = vsub.f32 1.0, %v1459
        %v1461 = vmul.f32 %v1458, %v1460
        %v1462 = vadd.f32 %v1458, %v1461
        %vm1463 = vweird.f32 %v1104
        %vm1464 = vweird.f32 %v1458
        %vm1465 = vmor %vm1463, %vm1464
        %v1466 = vsel %vm1465, %v1458, %v1462
        %v1467 = vand.u32 2147483647, %v1104
        %vm1468 = vcmp.eq.f32.partialorder %v1467, 8.507059e+37
        %v1469 = vand.u32 %v1104, 2147483648
        %v1470 = vor.u32 1.1754944e-38, %v1469
        %v1471 = vsel %vm1468, %v1470, %v1466
        %v1472 = vmul.f32 %v994, %v1471
        %v1473 = vmul.f32 %v996, %v1471
        %v1474 = vrcp.pop %v1107
        %v1475 = vmul.f32 %v1107, %v1474
        %v1476 = vsub.f32 1.0, %v1475
        %v1477 = vmul.f32 %v1474, %v1476
        %v1478 = vadd.f32 %v1474, %v1477
        %vm1479 = vweird.f32 %v1107
        %vm1480 = vweird.f32 %v1474
        %vm1481 = vmor %vm1479, %vm1480
        %v1482 = vsel %vm1481, %v1474, %v1478
        %v1483 = vand.u32 2147483647, %v1107
        %vm1484 = vcmp.eq.f32.partialorder %v1483, 8.507059e+37
        %v1485 = vand.u32 %v1107, 2147483648
        %v1486 = vor.u32 1.1754944e-38, %v1485
        %v1487 = vsel %vm1484, %v1486, %v1482
        %v1488 = vmul.f32 %v998, %v1487
        %v1489 = vmul.f32 %v1000, %v1487
        %v1490 = vrcp.pop %v1110
        %v1491 = vmul.f32 %v1110, %v1490
        %v1492 = vsub.f32 1.0, %v1491
        %v1493 = vmul.f32 %v1490, %v1492
        %v1494 = vadd.f32 %v1490, %v1493
        %vm1495 = vweird.f32 %v1110
        %vm1496 = vweird.f32 %v1490
        %vm1497 = vmor %vm1495, %vm1496
        %v1498 = vsel %vm1497, %v1490, %v1494
        %v1499 = vand.u32 2147483647, %v1110
        %vm1500 = vcmp.eq.f32.partialorder %v1499, 8.507059e+37
        %v1501 = vand.u32 %v1110, 2147483648
        %v1502 = vor.u32 1.1754944e-38, %v1501
        %v1503 = vsel %vm1500, %v1502, %v1498
        %v1504 = vmul.f32 %v1002, %v1503
        %v1505 = vmul.f32 %v1004, %v1503
        %v1506 = vrcp.pop %v1113
        %v1507 = vmul.f32 %v1113, %v1506
        %v1508 = vsub.f32 1.0, %v1507
        %v1509 = vmul.f32 %v1506, %v1508
        %v1510 = vadd.f32 %v1506, %v1509
        %vm1511 = vweird.f32 %v1113
        %vm1512 = vweird.f32 %v1506
        %vm1513 = vmor %vm1511, %vm1512
        %v1514 = vsel %vm1513, %v1506, %v1510
        %v1515 = vand.u32 2147483647, %v1113
        %vm1516 = vcmp.eq.f32.partialorder %v1515, 8.507059e+37
        %v1517 = vand.u32 %v1113, 2147483648
        %v1518 = vor.u32 1.1754944e-38, %v1517
        %v1519 = vsel %vm1516, %v1518, %v1514
        %v1520 = vmul.f32 %v1006, %v1519
        %v1521 = vmul.f32 %v1008, %v1519
        %v1522 = vrcp.pop %v1116
        %v1523 = vmul.f32 %v1116, %v1522
        %v1524 = vsub.f32 1.0, %v1523
        %v1525 = vmul.f32 %v1522, %v1524
        %v1526 = vadd.f32 %v1522, %v1525
        %vm1527 = vweird.f32 %v1116
        %vm1528 = vweird.f32 %v1522
        %vm1529 = vmor %vm1527, %vm1528
        %v1530 = vsel %vm1529, %v1522, %v1526
        %v1531 = vand.u32 2147483647, %v1116
        %vm1532 = vcmp.eq.f32.partialorder %v1531, 8.507059e+37
        %v1533 = vand.u32 %v1116, 2147483648
        %v1534 = vor.u32 1.1754944e-38, %v1533
        %v1535 = vsel %vm1532, %v1534, %v1530
        %v1536 = vmul.f32 %v1010, %v1535
        %v1537 = vmul.f32 %v1012, %v1535
        %v1538 = vrcp.pop %v1119
        %v1539 = vmul.f32 %v1119, %v1538
        %v1540 = vsub.f32 1.0, %v1539
        %v1541 = vmul.f32 %v1538, %v1540
        %v1542 = vadd.f32 %v1538, %v1541
        %vm1543 = vweird.f32 %v1119
        %vm1544 = vweird.f32 %v1538
        %vm1545 = vmor %vm1543, %vm1544
        %v1546 = vsel %vm1545, %v1538, %v1542
        %v1547 = vand.u32 2147483647, %v1119
        %vm1548 = vcmp.eq.f32.partialorder %v1547, 8.507059e+37
        %v1549 = vand.u32 %v1119, 2147483648
        %v1550 = vor.u32 1.1754944e-38, %v1549
        %v1551 = vsel %vm1548, %v1550, %v1546
        %v1552 = vmul.f32 %v1014, %v1551
        %v1553 = vmul.f32 %v1016, %v1551
        %v1554 = vrcp.pop %v1122
        %v1555 = vmul.f32 %v1122, %v1554
        %v1556 = vsub.f32 1.0, %v1555
        %v1557 = vmul.f32 %v1554, %v1556
        %v1558 = vadd.f32 %v1554, %v1557
        %vm1559 = vweird.f32 %v1122
        %vm1560 = vweird.f32 %v1554
        %vm1561 = vmor %vm1559, %vm1560
        %v1562 = vsel %vm1561, %v1554, %v1558
        %v1563 = vand.u32 2147483647, %v1122
        %vm1564 = vcmp.eq.f32.partialorder %v1563, 8.507059e+37
        %v1565 = vand.u32 %v1122, 2147483648
        %v1566 = vor.u32 1.1754944e-38, %v1565
        %v1567 = vsel %vm1564, %v1566, %v1562
        %v1568 = vmul.f32 %v1018, %v1567
        %v1569 = vmul.f32 %v1020, %v1567
        %v1570 = vrcp.pop %v1125
        %v1571 = vmul.f32 %v1125, %v1570
        %v1572 = vsub.f32 1.0, %v1571
        %v1573 = vmul.f32 %v1570, %v1572
        %v1574 = vadd.f32 %v1570, %v1573
        %vm1575 = vweird.f32 %v1125
        %vm1576 = vweird.f32 %v1570
        %vm1577 = vmor %vm1575, %vm1576
        %v1578 = vsel %vm1577, %v1570, %v1574
        %v1579 = vand.u32 2147483647, %v1125
        %vm1580 = vcmp.eq.f32.partialorder %v1579, 8.507059e+37
        %v1581 = vand.u32 %v1125, 2147483648
        %v1582 = vor.u32 1.1754944e-38, %v1581
        %v1583 = vsel %vm1580, %v1582, %v1578
        %v1584 = vmul.f32 %v1022, %v1583
        %v1585 = vmul.f32 %v1024, %v1583
        %v1586 = vrcp.pop %v1128
        %v1587 = vmul.f32 %v1128, %v1586
        %v1588 = vsub.f32 1.0, %v1587
        %v1589 = vmul.f32 %v1586, %v1588
        %v1590 = vadd.f32 %v1586, %v1589
        %vm1591 = vweird.f32 %v1128
        %vm1592 = vweird.f32 %v1586
        %vm1593 = vmor %vm1591, %vm1592
        %v1594 = vsel %vm1593, %v1586, %v1590
        %v1595 = vand.u32 2147483647, %v1128
        %vm1596 = vcmp.eq.f32.partialorder %v1595, 8.507059e+37
        %v1597 = vand.u32 %v1128, 2147483648
        %v1598 = vor.u32 1.1754944e-38, %v1597
        %v1599 = vsel %vm1596, %v1598, %v1594
        %v1600 = vmul.f32 %v1026, %v1599
        %v1601 = vmul.f32 %v1028, %v1599
        %v1602 = vrcp.pop %v1131
        %v1603 = vmul.f32 %v1131, %v1602
        %v1604 = vsub.f32 1.0, %v1603
        %v1605 = vmul.f32 %v1602, %v1604
        %v1606 = vadd.f32 %v1602, %v1605
        %vm1607 = vweird.f32 %v1131
        %vm1608 = vweird.f32 %v1602
        %vm1609 = vmor %vm1607, %vm1608
        %v1610 = vsel %vm1609, %v1602, %v1606
        %v1611 = vand.u32 2147483647, %v1131
        %vm1612 = vcmp.eq.f32.partialorder %v1611, 8.507059e+37
        %v1613 = vand.u32 %v1131, 2147483648
        %v1614 = vor.u32 1.1754944e-38, %v1613
        %v1615 = vsel %vm1612, %v1614, %v1610
        %v1616 = vmul.f32 %v1030, %v1615
        %v1617 = vmul.f32 %v1032, %v1615
        %v1618 = vrcp.pop %v1134
        %v1619 = vmul.f32 %v1134, %v1618
        %v1620 = vsub.f32 1.0, %v1619
        %v1621 = vmul.f32 %v1618, %v1620
        %v1622 = vadd.f32 %v1618, %v1621
        %vm1623 = vweird.f32 %v1134
        %vm1624 = vweird.f32 %v1618
        %vm1625 = vmor %vm1623, %vm1624
        %v1626 = vsel %vm1625, %v1618, %v1622
        %v1627 = vand.u32 2147483647, %v1134
        %vm1628 = vcmp.eq.f32.partialorder %v1627, 8.507059e+37
        %v1629 = vand.u32 %v1134, 2147483648
        %v1630 = vor.u32 1.1754944e-38, %v1629
        %v1631 = vsel %vm1628, %v1630, %v1626
        %v1632 = vmul.f32 %v1034, %v1631
        %v1633 = vmul.f32 %v1036, %v1631
        %v1634 = vrcp.pop %v1137
        %v1635 = vmul.f32 %v1137, %v1634
        %v1636 = vsub.f32 1.0, %v1635
        %v1637 = vmul.f32 %v1634, %v1636
        %v1638 = vadd.f32 %v1634, %v1637
        %vm1639 = vweird.f32 %v1137
        %vm1640 = vweird.f32 %v1634
        %vm1641 = vmor %vm1639, %vm1640
        %v1642 = vsel %vm1641, %v1634, %v1638
        %v1643 = vand.u32 2147483647, %v1137
        %vm1644 = vcmp.eq.f32.partialorder %v1643, 8.507059e+37
        %v1645 = vand.u32 %v1137, 2147483648
        %v1646 = vor.u32 1.1754944e-38, %v1645
        %v1647 = vsel %vm1644, %v1646, %v1642
        %v1648 = vmul.f32 %v1038, %v1647
        %v1649 = vmul.f32 %v1040, %v1647
        %1650 = vst [vmem:[%s326] sm:$0xff] %v1152
        %1651 = vst [vmem:[%s326 + $0x8] sm:$0xff] %v1153
        %1652 = vst [vmem:[%s326 + $0x10] sm:$0xff] %v1168
        %1653 = vst [vmem:[%s326 + $0x18] sm:$0xff] %v1169
        %1654 = vst [vmem:[%s326 + $0x20] sm:$0xff] %v1184
        %1655 = vst [vmem:[%s326 + $0x28] sm:$0xff] %v1185
        %1656 = vst [vmem:[%s326 + $0x30] sm:$0xff] %v1200
        %1657 = vst [vmem:[%s326 + $0x38] sm:$0xff] %v1201
        %1658 = vst [vmem:[%s326 + $0x40] sm:$0xff] %v1216
        %1659 = vst [vmem:[%s326 + $0x48] sm:$0xff] %v1217
        %1660 = vst [vmem:[%s326 + $0x50] sm:$0xff] %v1232
        %1661 = vst [vmem:[%s326 + $0x58] sm:$0xff] %v1233
        %1662 = vst [vmem:[%s326 + $0x60] sm:$0xff] %v1248
        %1663 = vst [vmem:[%s326 + $0x68] sm:$0xff] %v1249
        %1664 = vst [vmem:[%s326 + $0x70] sm:$0xff] %v1264
        %1665 = vst [vmem:[%s326 + $0x78] sm:$0xff] %v1265
        %1666 = vst [vmem:[%s326 + $0x80] sm:$0xff] %v1280
        %1667 = vst [vmem:[%s326 + $0x88] sm:$0xff] %v1281
        %1668 = vst [vmem:[%s326 + $0x90] sm:$0xff] %v1296
        %1669 = vst [vmem:[%s326 + $0x98] sm:$0xff] %v1297
        %1670 = vst [vmem:[%s326 + $0xa0] sm:$0xff] %v1312
        %1671 = vst [vmem:[%s326 + $0xa8] sm:$0xff] %v1313
        %1672 = vst [vmem:[%s326 + $0xb0] sm:$0xff] %v1328
        %1673 = vst [vmem:[%s326 + $0xb8] sm:$0xff] %v1329
        %1674 = vst [vmem:[%s326 + $0xc0] sm:$0xff] %v1344
        %1675 = vst [vmem:[%s326 + $0xc8] sm:$0xff] %v1345
        %1676 = vst [vmem:[%s326 + $0xd0] sm:$0xff] %v1360
        %1677 = vst [vmem:[%s326 + $0xd8] sm:$0xff] %v1361
        %1678 = vst [vmem:[%s326 + $0xe0] sm:$0xff] %v1376
        %1679 = vst [vmem:[%s326 + $0xe8] sm:$0xff] %v1377
        %1680 = vst [vmem:[%s326 + $0xf0] sm:$0xff] %v1392
        %1681 = vst [vmem:[%s326 + $0xf8] sm:$0xff] %v1393
        %1682 = vst [vmem:[%s326 + $0x100] sm:$0xff] %v1408
        %1683 = vst [vmem:[%s326 + $0x108] sm:$0xff] %v1409
        %1684 = vst [vmem:[%s326 + $0x110] sm:$0xff] %v1424
        %1685 = vst [vmem:[%s326 + $0x118] sm:$0xff] %v1425
        %1686 = vst [vmem:[%s326 + $0x120] sm:$0xff] %v1440
        %1687 = vst [vmem:[%s326 + $0x128] sm:$0xff] %v1441
        %1688 = vst [vmem:[%s326 + $0x130] sm:$0xff] %v1456
        %1689 = vst [vmem:[%s326 + $0x138] sm:$0xff] %v1457
        %1690 = vst [vmem:[%s326 + $0x140] sm:$0xff] %v1472
        %1691 = vst [vmem:[%s326 + $0x148] sm:$0xff] %v1473
        %1692 = vst [vmem:[%s326 + $0x150] sm:$0xff] %v1488
        %1693 = vst [vmem:[%s326 + $0x158] sm:$0xff] %v1489
        %1694 = vst [vmem:[%s326 + $0x160] sm:$0xff] %v1504
        %1695 = vst [vmem:[%s326 + $0x168] sm:$0xff] %v1505
        %1696 = vst [vmem:[%s326 + $0x170] sm:$0xff] %v1520
        %1697 = vst [vmem:[%s326 + $0x178] sm:$0xff] %v1521
        %1698 = vst [vmem:[%s326 + $0x180] sm:$0xff] %v1536
        %1699 = vst [vmem:[%s326 + $0x188] sm:$0xff] %v1537
        %1700 = vst [vmem:[%s326 + $0x190] sm:$0xff] %v1552
        %1701 = vst [vmem:[%s326 + $0x198] sm:$0xff] %v1553
        %1702 = vst [vmem:[%s326 + $0x1a0] sm:$0xff] %v1568
        %1703 = vst [vmem:[%s326 + $0x1a8] sm:$0xff] %v1569
        %1704 = vst [vmem:[%s326 + $0x1b0] sm:$0xff] %v1584
        %1705 = vst [vmem:[%s326 + $0x1b8] sm:$0xff] %v1585
        %1706 = vst [vmem:[%s326 + $0x1c0] sm:$0xff] %v1600
        %1707 = vst [vmem:[%s326 + $0x1c8] sm:$0xff] %v1601
        %1708 = vst [vmem:[%s326 + $0x1d0] sm:$0xff] %v1616
        %1709 = vst [vmem:[%s326 + $0x1d8] sm:$0xff] %v1617
        %1710 = vst [vmem:[%s326 + $0x1e0] sm:$0xff] %v1632
        %1711 = vst [vmem:[%s326 + $0x1e8] sm:$0xff] %v1633
        %1712 = vst [vmem:[%s326 + $0x1f0] sm:$0xff] %v1648
        %1713 = vst [vmem:[%s326 + $0x1f8] sm:$0xff] %v1649
        %v1714 = vld [vmem:[#allocation3] sm:$0xff]
        %v1715 = vld [vmem:[#allocation3 + $0x8] sm:$0xff]
        %v1716 = vpack.c.bf16 %v1168, %v1152
        %v1717 = vpack.c.bf16 %v1169, %v1153
        %v1718 = vpack.c.bf16 %v1200, %v1184
        %v1719 = vpack.c.bf16 %v1201, %v1185
        %v1720 = vpack.c.bf16 %v1232, %v1216
        %v1721 = vpack.c.bf16 %v1233, %v1217
        %v1722 = vpack.c.bf16 %v1264, %v1248
        %v1723 = vpack.c.bf16 %v1265, %v1249
        %v1724 = vpack.c.bf16 %v1296, %v1280
        %v1725 = vpack.c.bf16 %v1297, %v1281
        %v1726 = vpack.c.bf16 %v1328, %v1312
        %v1727 = vpack.c.bf16 %v1329, %v1313
        %v1728 = vpack.c.bf16 %v1360, %v1344
        %v1729 = vpack.c.bf16 %v1361, %v1345
        %v1730 = vpack.c.bf16 %v1392, %v1376
        %v1731 = vpack.c.bf16 %v1393, %v1377
        %v1732 = vpack.c.bf16 %v1424, %v1408
        %v1733 = vpack.c.bf16 %v1425, %v1409
        %v1734 = vpack.c.bf16 %v1456, %v1440
        %v1735 = vpack.c.bf16 %v1457, %v1441
        %v1736 = vpack.c.bf16 %v1488, %v1472
        %v1737 = vpack.c.bf16 %v1489, %v1473
        %v1738 = vpack.c.bf16 %v1520, %v1504
        %v1739 = vpack.c.bf16 %v1521, %v1505
        %v1740 = vpack.c.bf16 %v1552, %v1536
        %v1741 = vpack.c.bf16 %v1553, %v1537
        %v1742 = vpack.c.bf16 %v1584, %v1568
        %v1743 = vpack.c.bf16 %v1585, %v1569
        %v1744 = vpack.c.bf16 %v1616, %v1600
        %v1745 = vpack.c.bf16 %v1617, %v1601
        %v1746 = vpack.c.bf16 %v1648, %v1632
        %v1747 = vpack.c.bf16 %v1649, %v1633
        %v1750 = vunpack.c.l.b16 %v1714
        %v1751 = vunpack.c.h.b16 %v1714
        %v1752 = vunpack.c.l.b16 %v1715
        %v1753 = vunpack.c.h.b16 %v1715
        %v1754 = vpack.c.b16 %v1752, %v1750
        %v1755 = vpack.c.b16 %v1753, %v1751
        %1758 = vmatpush.bf16.xpose.msra.mxu0 %v1730
        %1759 = vmatpush.bf16.xpose.msra.mxu0 %v1728
        %1760 = vmatpush.bf16.xpose.msra.mxu0 %v1726
        %1761 = vmatpush.bf16.xpose.msra.mxu0 %v1724
        %1762 = vmatpush.bf16.xpose.msra.mxu0 %v1722
        %1763 = vmatpush.bf16.xpose.msra.mxu0 %v1720
        %1764 = vmatpush.bf16.xpose.msra.mxu0 %v1718
        %1765 = vmatpush.bf16.xpose.msra.mxu0 %v1716
        %1766 = vmatmul.bf16.gmra.mxu0 %v1754
        %v1767 = vpop.f32.mrf.mxu0
        %v1768 = vadd.f32 0.0, %v1767
        %v1769 = vpop.f32.mrf.mxu0
        %v1770 = vadd.f32 0.0, %v1769
        %1771 = vdwg.mxu0
        %1772 = vmatpush.bf16.xpose.msra.mxu0 %v1731
        %1773 = vmatpush.bf16.xpose.msra.mxu0 %v1729
        %1774 = vmatpush.bf16.xpose.msra.mxu0 %v1727
        %1775 = vmatpush.bf16.xpose.msra.mxu0 %v1725
        %1776 = vmatpush.bf16.xpose.msra.mxu0 %v1723
        %1777 = vmatpush.bf16.xpose.msra.mxu0 %v1721
        %1778 = vmatpush.bf16.xpose.msra.mxu0 %v1719
        %1779 = vmatpush.bf16.xpose.msra.mxu0 %v1717
        %1780 = vmatmul.bf16.gmra.mxu0 %v1755
        %v1781 = vpop.f32.mrf.mxu0
        %v1782 = vadd.f32 %v1768, %v1781
        %v1783 = vpop.f32.mrf.mxu0
        %v1784 = vadd.f32 %v1770, %v1783
        %1785 = vdwg.mxu0
        %1786 = vmatpush.bf16.xpose.msra.mxu0 %v1746
        %1787 = vmatpush.bf16.xpose.msra.mxu0 %v1744
        %1788 = vmatpush.bf16.xpose.msra.mxu0 %v1742
        %1789 = vmatpush.bf16.xpose.msra.mxu0 %v1740
        %1790 = vmatpush.bf16.xpose.msra.mxu0 %v1738
        %1791 = vmatpush.bf16.xpose.msra.mxu0 %v1736
        %1792 = vmatpush.bf16.xpose.msra.mxu0 %v1734
        %1793 = vmatpush.bf16.xpose.msra.mxu0 %v1732
        %1794 = vmatmul.bf16.gmra.mxu0 %v1754
        %v1795 = vpop.f32.mrf.mxu0
        %v1796 = vadd.f32 0.0, %v1795
        %v1797 = vpop.f32.mrf.mxu0
        %v1798 = vadd.f32 0.0, %v1797
        %1799 = vdwg.mxu0
        %1800 = vmatpush.bf16.xpose.msra.mxu0 %v1747
        %1801 = vmatpush.bf16.xpose.msra.mxu0 %v1745
        %1802 = vmatpush.bf16.xpose.msra.mxu0 %v1743
        %1803 = vmatpush.bf16.xpose.msra.mxu0 %v1741
        %1804 = vmatpush.bf16.xpose.msra.mxu0 %v1739
        %1805 = vmatpush.bf16.xpose.msra.mxu0 %v1737
        %1806 = vmatpush.bf16.xpose.msra.mxu0 %v1735
        %1807 = vmatpush.bf16.xpose.msra.mxu0 %v1733
        %1808 = vmatmul.bf16.gmra.mxu0 %v1755
        %v1809 = vpop.f32.mrf.mxu0
        %v1810 = vadd.f32 %v1796, %v1809
        %v1811 = vpop.f32.mrf.mxu0
        %v1812 = vadd.f32 %v1798, %v1811
        %1813 = vdwg.mxu0
        %v1814 = vstv %s1041
        %v1815 = vmul.f32 %v1814, %v1782
        %v1816 = vmul.f32 %v1814, %v1810
        %v1817 = vmul.f32 %v1814, %v1784
        %v1818 = vmul.f32 %v1814, %v1812
        %v1819 = vadd.f32 %v1815, %v478
        %v1820 = vadd.f32 %v1816, %v479
        %v1821 = vadd.f32 %v1817, %v480
        %v1822 = vadd.f32 %v1818, %v481
        %1823 = vst [vmem:[%s319] sm:$0xff] %v1819
        %1824 = vst [vmem:[%s319 + $0x8] sm:$0xff] %v1820
        %1825 = vst [vmem:[%s319 + $0x10] sm:$0xff] %v1821
        %1826 = vst [vmem:[%s319 + $0x18] sm:$0xff] %v1822
        %s1827 = sand.u32 %s182, 1
        %s1828 = scalar_lea.sflag [#allocation8], %s1827
        %s1829 = sand.u32 %s182, 1
        %s1830 = smul.addr %s1829, 32
        %s1831 = scalar_lea.vmem [#allocation9], %s1830
        %s1832 = sand.u32 %s210, 1
        %s1833 = scalar_lea.sflag [#allocation11], %s1832
        %s1834 = sand.u32 %s210, 1
        %s1835 = smul.addr %s1834, 512
        %s1836 = scalar_lea.vmem [#allocation10], %s1835
        // Predicated region
        $region53: #{tpu_custom_call.1} parent=43 // pred_check
          %p1837 = pneg %p192
        $region54: #{tpu_custom_call.1} parent=43 // pred_check_branch
          %1839 = sbr.rel (%p1837) target = $region56
        $region55: #{tpu_custom_call.1} parent=43 // pred_region
          %s1840 = smul.u32 2, %s34
          %1842 = vsyncadd %s1828, 0
          %s1843 = smul.addr %s33, 4
          %s1844 = sadd.s32 %s1840, %s1843
          %s1845 = smul.addr %s1844, 8
          %s1846 = scalar_lea.hbm %s6, %s1845
          %s1847 = sshll.u32 %s1831, 4
          %s1848 = int_to_ptr.vmem [resolvable:$true] %s1847
          %s1849 = sshll.u32 %s1846, 4
          %s1850 = int_to_ptr.hbm [resolvable:$true] %s1849
          %1855 = dma.vmem_to_hbm [thread:$0]  %s1848, 512, %s1850, %s1828, 256, 256, 16
        $region56: #{tpu_custom_call.1} parent=43 // pred_fallthru
          _
        // Predicated region
        $region57: #{tpu_custom_call.1} parent=43 // pred_check
          %p1856 = pneg %p220
        $region58: #{tpu_custom_call.1} parent=43 // pred_check_branch
          %1858 = sbr.rel (%p1856) target = $region60
        $region59: #{tpu_custom_call.1} parent=43 // pred_region
          %s1859 = smul.u32 32, %s34
          %1861 = vsyncadd %s1833, 0
          %s1862 = smul.addr %s1859, 2
          %s1863 = smul.addr %s33, 64
          %s1864 = sadd.s32 %s1862, %s1863
          %s1865 = smul.addr %s1864, 8
          %s1866 = scalar_lea.hbm %s7, %s1865
          %s1867 = sshll.u32 %s1836, 4
          %s1868 = int_to_ptr.vmem [resolvable:$true] %s1867
          %s1869 = sshll.u32 %s1866, 4
          %s1870 = int_to_ptr.hbm [resolvable:$true] %s1869
          %1875 = dma.vmem_to_hbm [thread:$0]  %s1868, 8192, %s1870, %s1833, 256, 256, 16
        $region60: #{tpu_custom_call.1} parent=43 // pred_fallthru
          _
      $region44: #{tpu_custom_call.1} parent=5 // pred_fallthru
        _
      %p1876 = scmp.le.s32.totalorder 2, %s24
      // Predicated region
      $region61: #{tpu_custom_call.1} parent=5 // pred_check
        %p1877 = pneg %p1876
      $region62: #{tpu_custom_call.1} parent=5 // pred_check_branch
        %1879 = sbr.rel (%p1877) target = $region64
      $region63: #{tpu_custom_call.1} parent=5 // pred_region
        %s1880 = ssub.s32 %s24, 2
        // Predicated region
        $region65: #{tpu_custom_call.1} parent=63 // pred_check
          %p1881 = pneg %p198
        $region66: #{tpu_custom_call.1} parent=63 // pred_check_branch
          %1883 = sbr.rel (%p1881) target = $region68
        $region67: #{tpu_custom_call.1} parent=63 // pred_region
          %s1884 = sand.u32 %s183, 1
          %s1885 = scalar_lea.sflag [#allocation8], %s1884
          %s1886 = sand.u32 %s183, 1
          %s1887 = smul.addr %s1886, 32
          %s1888 = scalar_lea.vmem [#allocation9], %s1887
          %1890 = dma.done %s1885, 512
        $region68: #{tpu_custom_call.1} parent=63 // pred_fallthru
          _
        // Predicated region
        $region69: #{tpu_custom_call.1} parent=63 // pred_check
          %p1891 = pneg %p226
        $region70: #{tpu_custom_call.1} parent=63 // pred_check_branch
          %1893 = sbr.rel (%p1891) target = $region72
        $region71: #{tpu_custom_call.1} parent=63 // pred_region
          %s1894 = sand.u32 %s211, 1
          %s1895 = scalar_lea.sflag [#allocation11], %s1894
          %s1896 = sand.u32 %s211, 1
          %s1897 = smul.addr %s1896, 512
          %s1898 = scalar_lea.vmem [#allocation10], %s1897
          %1900 = dma.done %s1895, 8192
        $region72: #{tpu_custom_call.1} parent=63 // pred_fallthru
          _
      $region64: #{tpu_custom_call.1} parent=5 // pred_fallthru
        _
    $region6: #{tpu_custom_call.1} parent=1 // loop_footer
      %s28 = sadd.s32 1, %s24
    $region7: #{tpu_custom_call.1} parent=1 // loop_footer_branch
      %23 = sbr.rel target = $region3
    $region8: #{tpu_custom_call.1} parent=1 // loop_exit
      _
    %1901 = vsyncpa [#allocation7], 1
    %s1902 = scalar_lea.sflag [#allocation7], 1
    %1903 = vsyncpa %s1902, 1
    %1904 = vsyncpa [#allocation8], 1
    %s1905 = scalar_lea.sflag [#allocation8], 1
    %1906 = vsyncpa %s1905, 1
    %1907 = vsyncpa [#allocation11], 1
    %s1908 = scalar_lea.sflag [#allocation11], 1
    %1909 = vsyncpa %s1908, 1

</llo_original>
